<compile_context>
chip_gen: v7x
topology: tpu7x:2x2x1
jax: 0.10.0
libtpu: 0.0.40
codegen_flags: <defaults>
</compile_context>

<pallas_src>
import functools

import jax
import jax.numpy as jnp
from jax.experimental import pallas as pl
from jax.experimental.pallas import tpu as pltpu


def _round_up(x, m):
    return ((x + m - 1) // m) * m


def _softplus(h):
    # Numerically stable softplus (== F.softplus): max(h,0) + log(1 + exp(-|h|))
    return jnp.maximum(h, 0.0) + jnp.log(1.0 + jnp.exp(-jnp.abs(h)))


# ---------------------------------------------------------------------------
# Pallas kernel: all S Monte-Carlo forward passes in one invocation.
# ---------------------------------------------------------------------------
def _bayesian_forward_kernel(x_ref, m0_ref, s0_ref, e0_ref,
                             m1_ref, s1_ref, e1_ref,
                             mo_ref, so_ref, eo_ref,
                             out_ref, w0_scr, w1_scr, wo_scr,
                             *, num_samples, num_components, comp_pad):
    S = num_samples
    D, H0 = m0_ref.shape
    _, H1 = m1_ref.shape
    _, OW = mo_ref.shape
    B = x_ref.shape[0]

    # Sample-invariant params loaded once (hoisted out of the S loop).  The
    # std = exp(log_std) was already computed once in the wrapper (opt 4).
    m0, s0 = m0_ref[...], s0_ref[...]
    m1, s1 = m1_ref[...], s1_ref[...]
    mo, so = mo_ref[...], so_ref[...]

    # Fuse the S samples into the MXU lane dimension (opt 2):
    #   W0_all : (D, S*H0)     dense   -- sample s lives in lanes [s*H0, (s+1)*H0)
    #   W1_bd  : (S*H0, S*H1)  block-diagonal
    #   Wo_bd  : (S*H1, S*OW)  block-diagonal
    # assembled in VMEM scratch from compact per-sample eps.
    w1_scr[...] = jnp.zeros_like(w1_scr)
    wo_scr[...] = jnp.zeros_like(wo_scr)
    for s in range(S):   # static unroll: reparameterize + scatter each diag block
        w0_scr[:, s * H0:(s + 1) * H0] = m0 + s0 * e0_ref[s]
        w1_scr[s * H0:(s + 1) * H0, s * H1:(s + 1) * H1] = m1 + s1 * e1_ref[s]
        wo_scr[s * H1:(s + 1) * H1, s * OW:(s + 1) * OW] = mo + so * eo_ref[s]

    # Three full-width MXU passes cover all S samples at once (instead of 3*S
    # lane-sparse 32-wide passes spread over an S-step grid).
    h = _softplus(jnp.dot(x_ref[...], w0_scr[...],
                          preferred_element_type=jnp.float32))
    h = _softplus(jnp.dot(h, w1_scr[...], preferred_element_type=jnp.float32))
    out = jnp.dot(h, wo_scr[...], preferred_element_type=jnp.float32)  # (B, S*OW)

    # Lane-dense store of the raw outputs; component params are already final.
    out_ref[...] = out

    # Per-sample masked softmax over the 128-wide logit slab; every slice below
    # is 128-lane aligned.  Exact divide so rows sum to 1.
    lane = jax.lax.broadcasted_iota(jnp.int32, (B, OW - comp_pad), 1)
    neg_big = jnp.float32(-1e30)
    for s in range(S):
        lo = s * OW + comp_pad
        hi = (s + 1) * OW
        masked = jnp.where(lane < num_components, out[:, lo:hi], neg_big)
        mx = jnp.max(masked, axis=1, keepdims=True)
        e = jnp.exp(masked - mx)                 # pad lanes underflow to exactly 0
        out_ref[:, lo:hi] = e / jnp.sum(e, axis=1, keepdims=True)


# ---------------------------------------------------------------------------
# Wrapper: one grid-less pallas_call; whole (tiny) arrays live in VMEM.
# ---------------------------------------------------------------------------
def bayesian_forward(x, m0_t, std0_t, eps0, m1_t, std1_t, eps1,
                     mo_tp, stdo_tp, eps_o, *,
                     num_components, comp_width, comp_pad):
    """Runs S Monte-Carlo forward passes of the Bayesian MLP in one pallas_call.

    x              : (B, D) f32
    m*_t / std*_t  : hidden-layer mean / exp(log_std), pre-transposed (in, out)
    mo_tp / stdo_tp: output-layer mean / std, transposed + column-reordered and
                     zero-padded to (H1, OW) with layout [comp | logits | 0-pad]
    eps*           : per-sample N(0,1) draws, leading axis S (output-layer eps is
                     zero in the padded columns)
    """
    S = eps0.shape[0]
    B, D = x.shape
    H0 = m0_t.shape[1]
    H1 = m1_t.shape[1]
    OW = mo_tp.shape[1]

    kernel = functools.partial(_bayesian_forward_kernel,
                               num_samples=S,
                               num_components=num_components,
                               comp_pad=comp_pad)

    out = pl.pallas_call(
        kernel,
        out_shape=jax.ShapeDtypeStruct((B, S * OW), jnp.float32),
        scratch_shapes=[
            pltpu.VMEM((D, S * H0), jnp.float32),        # W0_all
            pltpu.VMEM((S * H0, S * H1), jnp.float32),   # W1 block-diagonal
            pltpu.VMEM((S * H1, S * OW), jnp.float32),   # Wout block-diagonal
        ],
    )(x, m0_t, std0_t, eps0, m1_t, std1_t, eps1, mo_tp, stdo_tp, eps_o)

    out = out.reshape(B, S, OW).transpose(1, 0, 2)        # (S, B, OW)
    mixture_weights = out[:, :, comp_pad:comp_pad + num_components]
    component_params = out[:, :, :comp_width]
    return mixture_weights, component_params


# ---------------------------------------------------------------------------
# Parameter construction + output-layer column reorder/pad (plain JAX glue)
# ---------------------------------------------------------------------------
def init_bayesian_layer(key, in_dim, out_dim):
    # mean = randn(out, in) * sqrt(2 / (out + in)); log_std = zeros(out, in)
    mean = jax.random.normal(key, (out_dim, in_dim), jnp.float32) * jnp.sqrt(
        2.0 / (out_dim + in_dim))
    log_std = jnp.zeros((out_dim, in_dim), jnp.float32)
    return mean, log_std


def reorder_pad_output_t(mat_t, num_components, comp_pad, logit_pad):
    """(..., H, K + compW) columns [logits | comp] -> (..., H, comp_pad + logit_pad)
    columns [comp | 0-pad | logits | 0-pad], so the logits start on a 128-lane
    boundary.  Padding is zero, so padded std / eps columns contribute nothing."""
    K = num_components
    logit_cols = mat_t[..., :K]
    comp_cols = mat_t[..., K:]
    pad_lead = [(0, 0)] * (mat_t.ndim - 1)
    comp_cols = jnp.pad(comp_cols, pad_lead + [(0, comp_pad - comp_cols.shape[-1])])
    logit_cols = jnp.pad(logit_cols, pad_lead + [(0, logit_pad - K)])
    return jnp.concatenate([comp_cols, logit_cols], axis=-1)


if __name__ == "__main__":
    # Small shapes consistent with the module's forward.
    batch = 8
    input_dim = 16
    hidden_dims = [32, 32]
    output_components = 4
    num_samples = 4                       # Monte-Carlo weight samples (fused in-kernel)

    comp_width = output_components * 2 * input_dim          # 128
    comp_pad = _round_up(comp_width, 128)                   # 128
    logit_pad = _round_up(output_components, 128)           # 128
    out_w = comp_pad + logit_pad                             # 256
    out_nodes = output_components + comp_width               # 132

    root = jax.random.PRNGKey(0)
    k_x, k_p0, k_p1, k_po, k_e0, k_e1, k_eo = jax.random.split(root, 7)

    m0, ls0 = init_bayesian_layer(k_p0, input_dim, hidden_dims[0])
    m1, ls1 = init_bayesian_layer(k_p1, hidden_dims[0], hidden_dims[1])
    mo, lso = init_bayesian_layer(k_po, hidden_dims[1], out_nodes)

    # Pre-transpose so the kernel computes x @ W (== torch.mm(x, w.t())) and
    # hoist std = exp(log_std) (sample-invariant) out of the kernel.
    m0_t, std0_t = m0.T, jnp.exp(ls0).T
    m1_t, std1_t = m1.T, jnp.exp(ls1).T
    mo_tp = reorder_pad_output_t(mo.T, output_components, comp_pad, logit_pad)
    stdo_tp = reorder_pad_output_t(jnp.exp(lso).T, output_components, comp_pad, logit_pad)

    # Reparameterization noise (== torch.randn_like) in the kernel's (in, out)
    # layout; output-layer eps only covers the 132 real columns, pads are zero.
    # TODO(synk): could instead be drawn on-chip with pltpu.prng_* to remove the
    # per-sample HBM traffic entirely; kept as explicit inputs for verifiability.
    eps0 = jax.random.normal(k_e0, (num_samples, input_dim, hidden_dims[0]), jnp.float32)
    eps1 = jax.random.normal(k_e1, (num_samples, hidden_dims[0], hidden_dims[1]), jnp.float32)
    eps_o_raw = jax.random.normal(k_eo, (num_samples, hidden_dims[1], out_nodes), jnp.float32)
    eps_o = reorder_pad_output_t(eps_o_raw, output_components, comp_pad, logit_pad)

    x = jax.random.normal(k_x, (batch, input_dim), jnp.float32)

    mixture_weights, component_params = bayesian_forward(
        x, m0_t, std0_t, eps0, m1_t, std1_t, eps1, mo_tp, stdo_tp, eps_o,
        num_components=output_components, comp_width=comp_width, comp_pad=comp_pad)
    jax.block_until_ready((mixture_weights, component_params))

    assert mixture_weights.shape == (num_samples, batch, output_components)
    assert component_params.shape == (num_samples, batch, comp_width)
    assert bool(jnp.all(jnp.isfinite(mixture_weights)))
    assert bool(jnp.all(jnp.isfinite(component_params)))
    # Exact-divide softmax -> rows sum to 1 up to f32 rounding.
    assert bool(jnp.allclose(jnp.sum(mixture_weights, axis=-1), 1.0, atol=1e-3))

    # Pure-JAX reference (same eps) — loose tolerances to stay robust to MXU
    # matmul precision while still catching layout / block-diagonal bugs.
    hi = jax.lax.Precision.HIGHEST
    for s in range(num_samples):
        w0 = m0_t + std0_t * eps0[s]
        w1 = m1_t + std1_t * eps1[s]
        wo = mo_tp + stdo_tp * eps_o[s]
        h = jax.nn.softplus(jnp.dot(x, w0, precision=hi))
        h = jax.nn.softplus(jnp.dot(h, w1, precision=hi))
        o_ref = jnp.dot(h, wo, precision=hi)
        mix_ref = jax.nn.softmax(o_ref[:, comp_pad:comp_pad + output_components], axis=1)
        comp_ref = o_ref[:, :comp_width]
        assert bool(jnp.allclose(mixture_weights[s], mix_ref, atol=5e-2, rtol=5e-2))
        assert bool(jnp.allclose(component_params[s], comp_ref, atol=2.5e-1, rtol=2e-2))

    # TODO(synk): pyro guide()/SVI training loop is inference machinery, not part
    # of the forward pass; not translated.
    print("KERNEL_OK")
</pallas_src>

<mosaic_0001>
module attributes {stable_mosaic.version = 11 : i64} {
  func.func @_bayesian_forward_kernel(%arg0: memref<8x16xf32, #tpu.memory_space<vmem>>, %arg1: memref<16x32xf32, #tpu.memory_space<vmem>>, %arg2: memref<16x32xf32, #tpu.memory_space<vmem>>, %arg3: memref<4x16x32xf32, #tpu.memory_space<vmem>>, %arg4: memref<32x32xf32, #tpu.memory_space<vmem>>, %arg5: memref<32x32xf32, #tpu.memory_space<vmem>>, %arg6: memref<4x32x32xf32, #tpu.memory_space<vmem>>, %arg7: memref<32x256xf32, #tpu.memory_space<vmem>>, %arg8: memref<32x256xf32, #tpu.memory_space<vmem>>, %arg9: memref<4x32x256xf32, #tpu.memory_space<vmem>>, %arg10: memref<8x1024xf32, #tpu.memory_space<vmem>>, %arg11: memref<16x128xf32, #tpu.memory_space<vmem>>, %arg12: memref<128x128xf32, #tpu.memory_space<vmem>>, %arg13: memref<128x1024xf32, #tpu.memory_space<vmem>>) attributes {dimension_semantics = [], scalar_prefetch = 0 : i64, scratch_operands = 3 : i64, tpu.core_type = #tpu.core_type<tc>} {
    %c0 = arith.constant 0 : index
    %c0_0 = arith.constant 0 : index
    %0 = vector.load %arg1[%c0, %c0_0] : memref<16x32xf32, #tpu.memory_space<vmem>>, vector<16x32xf32>
    %c0_1 = arith.constant 0 : index
    %c0_2 = arith.constant 0 : index
    %1 = vector.load %arg2[%c0_1, %c0_2] : memref<16x32xf32, #tpu.memory_space<vmem>>, vector<16x32xf32>
    %c0_3 = arith.constant 0 : index
    %c0_4 = arith.constant 0 : index
    %2 = vector.load %arg4[%c0_3, %c0_4] : memref<32x32xf32, #tpu.memory_space<vmem>>, vector<32x32xf32>
    %c0_5 = arith.constant 0 : index
    %c0_6 = arith.constant 0 : index
    %3 = vector.load %arg5[%c0_5, %c0_6] : memref<32x32xf32, #tpu.memory_space<vmem>>, vector<32x32xf32>
    %c0_7 = arith.constant 0 : index
    %c0_8 = arith.constant 0 : index
    %4 = vector.load %arg7[%c0_7, %c0_8] : memref<32x256xf32, #tpu.memory_space<vmem>>, vector<32x256xf32>
    %c0_9 = arith.constant 0 : index
    %c0_10 = arith.constant 0 : index
    %5 = vector.load %arg8[%c0_9, %c0_10] : memref<32x256xf32, #tpu.memory_space<vmem>>, vector<32x256xf32>
    %cst = arith.constant 0.000000e+00 : f32
    %6 = vector.broadcast %cst : f32 to vector<128x128xf32>
    %c0_11 = arith.constant 0 : index
    %c0_12 = arith.constant 0 : index
    %7 = vector.load %arg12[%c0_11, %c0_12] : memref<128x128xf32, #tpu.memory_space<vmem>>, vector<128x128xf32>
    tpu.vector_store %arg12[%c0_11, %c0_12], %6 {strides = array<i32>} : memref<128x128xf32, #tpu.memory_space<vmem>>, vector<128x128xf32>,
    %cst_13 = arith.constant 0.000000e+00 : f32
    %8 = vector.broadcast %cst_13 : f32 to vector<128x1024xf32>
    %c0_14 = arith.constant 0 : index
    %c0_15 = arith.constant 0 : index
    %9 = vector.load %arg13[%c0_14, %c0_15] : memref<128x1024xf32, #tpu.memory_space<vmem>>, vector<128x1024xf32>
    tpu.vector_store %arg13[%c0_14, %c0_15], %8 {strides = array<i32>} : memref<128x1024xf32, #tpu.memory_space<vmem>>, vector<128x1024xf32>,
    %c0_16 = arith.constant 0 : index
    %c0_17 = arith.constant 0 : index
    %c0_18 = arith.constant 0 : index
    %10 = vector.load %arg3[%c0_16, %c0_17, %c0_18] : memref<4x16x32xf32, #tpu.memory_space<vmem>>, vector<1x16x32xf32>
    %11 = vector.shape_cast %10 : vector<1x16x32xf32> to vector<16x32xf32>
    %12 = arith.mulf %1, %11 : vector<16x32xf32>
    %13 = arith.addf %0, %12 : vector<16x32xf32>
    %c0_19 = arith.constant 0 : index
    %c0_20 = arith.constant 0 : index
    %14 = vector.load %arg11[%c0_19, %c0_20] : memref<16x128xf32, #tpu.memory_space<vmem>>, vector<16x32xf32>
    tpu.vector_store %arg11[%c0_19, %c0_20], %13 {strides = array<i32>} : memref<16x128xf32, #tpu.memory_space<vmem>>, vector<16x32xf32>,
    %c0_21 = arith.constant 0 : index
    %c0_22 = arith.constant 0 : index
    %c0_23 = arith.constant 0 : index
    %15 = vector.load %arg6[%c0_21, %c0_22, %c0_23] : memref<4x32x32xf32, #tpu.memory_space<vmem>>, vector<1x32x32xf32>
    %16 = vector.shape_cast %15 : vector<1x32x32xf32> to vector<32x32xf32>
    %17 = arith.mulf %3, %16 : vector<32x32xf32>
    %18 = arith.addf %2, %17 : vector<32x32xf32>
    %c0_24 = arith.constant 0 : index
    %c0_25 = arith.constant 0 : index
    %19 = vector.load %arg12[%c0_24, %c0_25] : memref<128x128xf32, #tpu.memory_space<vmem>>, vector<32x32xf32>
    tpu.vector_store %arg12[%c0_24, %c0_25], %18 {strides = array<i32>} : memref<128x128xf32, #tpu.memory_space<vmem>>, vector<32x32xf32>,
    %c0_26 = arith.constant 0 : index
    %c0_27 = arith.constant 0 : index
    %c0_28 = arith.constant 0 : index
    %20 = vector.load %arg9[%c0_26, %c0_27, %c0_28] : memref<4x32x256xf32, #tpu.memory_space<vmem>>, vector<1x32x256xf32>
    %21 = vector.shape_cast %20 : vector<1x32x256xf32> to vector<32x256xf32>
    %22 = arith.mulf %5, %21 : vector<32x256xf32>
    %23 = arith.addf %4, %22 : vector<32x256xf32>
    %c0_29 = arith.constant 0 : index
    %c0_30 = arith.constant 0 : index
    %24 = vector.load %arg13[%c0_29, %c0_30] : memref<128x1024xf32, #tpu.memory_space<vmem>>, vector<32x256xf32>
    tpu.vector_store %arg13[%c0_29, %c0_30], %23 {strides = array<i32>} : memref<128x1024xf32, #tpu.memory_space<vmem>>, vector<32x256xf32>,
    %c1 = arith.constant 1 : index
    %c0_31 = arith.constant 0 : index
    %c0_32 = arith.constant 0 : index
    %25 = vector.load %arg3[%c1, %c0_31, %c0_32] : memref<4x16x32xf32, #tpu.memory_space<vmem>>, vector<1x16x32xf32>
    %26 = vector.shape_cast %25 : vector<1x16x32xf32> to vector<16x32xf32>
    %27 = arith.mulf %1, %26 : vector<16x32xf32>
    %28 = arith.addf %0, %27 : vector<16x32xf32>
    %c0_33 = arith.constant 0 : index
    %c32 = arith.constant 32 : index
    %29 = vector.load %arg11[%c0_33, %c32] : memref<16x128xf32, #tpu.memory_space<vmem>>, vector<16x32xf32>
    tpu.vector_store %arg11[%c0_33, %c32], %28 {strides = array<i32>} : memref<16x128xf32, #tpu.memory_space<vmem>>, vector<16x32xf32>,
    %c1_34 = arith.constant 1 : index
    %c0_35 = arith.constant 0 : index
    %c0_36 = arith.constant 0 : index
    %30 = vector.load %arg6[%c1_34, %c0_35, %c0_36] : memref<4x32x32xf32, #tpu.memory_space<vmem>>, vector<1x32x32xf32>
    %31 = vector.shape_cast %30 : vector<1x32x32xf32> to vector<32x32xf32>
    %32 = arith.mulf %3, %31 : vector<32x32xf32>
    %33 = arith.addf %2, %32 : vector<32x32xf32>
    %c32_37 = arith.constant 32 : index
    %c32_38 = arith.constant 32 : index
    %34 = vector.load %arg12[%c32_37, %c32_38] : memref<128x128xf32, #tpu.memory_space<vmem>>, vector<32x32xf32>
    tpu.vector_store %arg12[%c32_37, %c32_38], %33 {strides = array<i32>} : memref<128x128xf32, #tpu.memory_space<vmem>>, vector<32x32xf32>,
    %c1_39 = arith.constant 1 : index
    %c0_40 = arith.constant 0 : index
    %c0_41 = arith.constant 0 : index
    %35 = vector.load %arg9[%c1_39, %c0_40, %c0_41] : memref<4x32x256xf32, #tpu.memory_space<vmem>>, vector<1x32x256xf32>
    %36 = vector.shape_cast %35 : vector<1x32x256xf32> to vector<32x256xf32>
    %37 = arith.mulf %5, %36 : vector<32x256xf32>
    %38 = arith.addf %4, %37 : vector<32x256xf32>
    %c32_42 = arith.constant 32 : index
    %c256 = arith.constant 256 : index
    %39 = vector.load %arg13[%c32_42, %c256] : memref<128x1024xf32, #tpu.memory_space<vmem>>, vector<32x256xf32>
    tpu.vector_store %arg13[%c32_42, %c256], %38 {strides = array<i32>} : memref<128x1024xf32, #tpu.memory_space<vmem>>, vector<32x256xf32>,
    %c2 = arith.constant 2 : index
    %c0_43 = arith.constant 0 : index
    %c0_44 = arith.constant 0 : index
    %40 = vector.load %arg3[%c2, %c0_43, %c0_44] : memref<4x16x32xf32, #tpu.memory_space<vmem>>, vector<1x16x32xf32>
    %41 = vector.shape_cast %40 : vector<1x16x32xf32> to vector<16x32xf32>
    %42 = arith.mulf %1, %41 : vector<16x32xf32>
    %43 = arith.addf %0, %42 : vector<16x32xf32>
    %c0_45 = arith.constant 0 : index
    %c64 = arith.constant 64 : index
    %44 = vector.load %arg11[%c0_45, %c64] : memref<16x128xf32, #tpu.memory_space<vmem>>, vector<16x32xf32>
    tpu.vector_store %arg11[%c0_45, %c64], %43 {strides = array<i32>} : memref<16x128xf32, #tpu.memory_space<vmem>>, vector<16x32xf32>,
    %c2_46 = arith.constant 2 : index
    %c0_47 = arith.constant 0 : index
    %c0_48 = arith.constant 0 : index
    %45 = vector.load %arg6[%c2_46, %c0_47, %c0_48] : memref<4x32x32xf32, #tpu.memory_space<vmem>>, vector<1x32x32xf32>
    %46 = vector.shape_cast %45 : vector<1x32x32xf32> to vector<32x32xf32>
    %47 = arith.mulf %3, %46 : vector<32x32xf32>
    %48 = arith.addf %2, %47 : vector<32x32xf32>
    %c64_49 = arith.constant 64 : index
    %c64_50 = arith.constant 64 : index
    %49 = vector.load %arg12[%c64_49, %c64_50] : memref<128x128xf32, #tpu.memory_space<vmem>>, vector<32x32xf32>
    tpu.vector_store %arg12[%c64_49, %c64_50], %48 {strides = array<i32>} : memref<128x128xf32, #tpu.memory_space<vmem>>, vector<32x32xf32>,
    %c2_51 = arith.constant 2 : index
    %c0_52 = arith.constant 0 : index
    %c0_53 = arith.constant 0 : index
    %50 = vector.load %arg9[%c2_51, %c0_52, %c0_53] : memref<4x32x256xf32, #tpu.memory_space<vmem>>, vector<1x32x256xf32>
    %51 = vector.shape_cast %50 : vector<1x32x256xf32> to vector<32x256xf32>
    %52 = arith.mulf %5, %51 : vector<32x256xf32>
    %53 = arith.addf %4, %52 : vector<32x256xf32>
    %c64_54 = arith.constant 64 : index
    %c512 = arith.constant 512 : index
    %54 = vector.load %arg13[%c64_54, %c512] : memref<128x1024xf32, #tpu.memory_space<vmem>>, vector<32x256xf32>
    tpu.vector_store %arg13[%c64_54, %c512], %53 {strides = array<i32>} : memref<128x1024xf32, #tpu.memory_space<vmem>>, vector<32x256xf32>,
    %c3 = arith.constant 3 : index
    %c0_55 = arith.constant 0 : index
    %c0_56 = arith.constant 0 : index
    %55 = vector.load %arg3[%c3, %c0_55, %c0_56] : memref<4x16x32xf32, #tpu.memory_space<vmem>>, vector<1x16x32xf32>
    %56 = vector.shape_cast %55 : vector<1x16x32xf32> to vector<16x32xf32>
    %57 = arith.mulf %1, %56 : vector<16x32xf32>
    %58 = arith.addf %0, %57 : vector<16x32xf32>
    %c0_57 = arith.constant 0 : index
    %c96 = arith.constant 96 : index
    %59 = vector.load %arg11[%c0_57, %c96] : memref<16x128xf32, #tpu.memory_space<vmem>>, vector<16x32xf32>
    tpu.vector_store %arg11[%c0_57, %c96], %58 {strides = array<i32>} : memref<16x128xf32, #tpu.memory_space<vmem>>, vector<16x32xf32>,
    %c3_58 = arith.constant 3 : index
    %c0_59 = arith.constant 0 : index
    %c0_60 = arith.constant 0 : index
    %60 = vector.load %arg6[%c3_58, %c0_59, %c0_60] : memref<4x32x32xf32, #tpu.memory_space<vmem>>, vector<1x32x32xf32>
    %61 = vector.shape_cast %60 : vector<1x32x32xf32> to vector<32x32xf32>
    %62 = arith.mulf %3, %61 : vector<32x32xf32>
    %63 = arith.addf %2, %62 : vector<32x32xf32>
    %c96_61 = arith.constant 96 : index
    %c96_62 = arith.constant 96 : index
    %64 = vector.load %arg12[%c96_61, %c96_62] : memref<128x128xf32, #tpu.memory_space<vmem>>, vector<32x32xf32>
    tpu.vector_store %arg12[%c96_61, %c96_62], %63 {strides = array<i32>} : memref<128x128xf32, #tpu.memory_space<vmem>>, vector<32x32xf32>,
    %c3_63 = arith.constant 3 : index
    %c0_64 = arith.constant 0 : index
    %c0_65 = arith.constant 0 : index
    %65 = vector.load %arg9[%c3_63, %c0_64, %c0_65] : memref<4x32x256xf32, #tpu.memory_space<vmem>>, vector<1x32x256xf32>
    %66 = vector.shape_cast %65 : vector<1x32x256xf32> to vector<32x256xf32>
    %67 = arith.mulf %5, %66 : vector<32x256xf32>
    %68 = arith.addf %4, %67 : vector<32x256xf32>
    %c96_66 = arith.constant 96 : index
    %c768 = arith.constant 768 : index
    %69 = vector.load %arg13[%c96_66, %c768] : memref<128x1024xf32, #tpu.memory_space<vmem>>, vector<32x256xf32>
    tpu.vector_store %arg13[%c96_66, %c768], %68 {strides = array<i32>} : memref<128x1024xf32, #tpu.memory_space<vmem>>, vector<32x256xf32>,
    %c0_67 = arith.constant 0 : index
    %c0_68 = arith.constant 0 : index
    %70 = vector.load %arg0[%c0_67, %c0_68] : memref<8x16xf32, #tpu.memory_space<vmem>>, vector<8x16xf32>
    %c0_69 = arith.constant 0 : index
    %c0_70 = arith.constant 0 : index
    %71 = vector.load %arg11[%c0_69, %c0_70] : memref<16x128xf32, #tpu.memory_space<vmem>>, vector<16x128xf32>
    %cst_71 = arith.constant dense<0.000000e+00> : vector<8x128xf32>
    %72 = tpu.matmul %70, %71, %cst_71 {dimension_numbers = #tpu.dot_dimension_numbers<[1], [0], [0], [1], [0, 0, 1, 1], [], []>} : vector<8x16xf32>, vector<16x128xf32>, vector<8x128xf32> -> vector<8x128xf32>
    %cst_72 = arith.constant 0.000000e+00 : f32
    %73 = vector.broadcast %cst_72 : f32 to vector<8x128xf32>
    %74 = arith.maximumf %72, %73 : vector<8x128xf32>
    %75 = math.absf %72 : vector<8x128xf32>
    %cst_73 = arith.constant 0.000000e+00 : f32
    %76 = vector.broadcast %cst_73 : f32 to vector<8x128xf32>
    %77 = arith.subf %76, %75 : vector<8x128xf32>
    %78 = math.exp %77 : vector<8x128xf32>
    %cst_74 = arith.constant 1.000000e+00 : f32
    %79 = vector.broadcast %cst_74 : f32 to vector<8x128xf32>
    %80 = arith.addf %79, %78 : vector<8x128xf32>
    %81 = math.log %80 : vector<8x128xf32>
    %82 = arith.addf %74, %81 : vector<8x128xf32>
    %c0_75 = arith.constant 0 : index
    %c0_76 = arith.constant 0 : index
    %83 = vector.load %arg12[%c0_75, %c0_76] : memref<128x128xf32, #tpu.memory_space<vmem>>, vector<128x128xf32>
    %cst_77 = arith.constant dense<0.000000e+00> : vector<8x128xf32>
    %84 = tpu.matmul %82, %83, %cst_77 {dimension_numbers = #tpu.dot_dimension_numbers<[1], [0], [0], [1], [0, 0, 1, 1], [], []>} : vector<8x128xf32>, vector<128x128xf32>, vector<8x128xf32> -> vector<8x128xf32>
    %cst_78 = arith.constant 0.000000e+00 : f32
    %85 = vector.broadcast %cst_78 : f32 to vector<8x128xf32>
    %86 = arith.maximumf %84, %85 : vector<8x128xf32>
    %87 = math.absf %84 : vector<8x128xf32>
    %cst_79 = arith.constant 0.000000e+00 : f32
    %88 = vector.broadcast %cst_79 : f32 to vector<8x128xf32>
    %89 = arith.subf %88, %87 : vector<8x128xf32>
    %90 = math.exp %89 : vector<8x128xf32>
    %cst_80 = arith.constant 1.000000e+00 : f32
    %91 = vector.broadcast %cst_80 : f32 to vector<8x128xf32>
    %92 = arith.addf %91, %90 : vector<8x128xf32>
    %93 = math.log %92 : vector<8x128xf32>
    %94 = arith.addf %86, %93 : vector<8x128xf32>
    %c0_81 = arith.constant 0 : index
    %c0_82 = arith.constant 0 : index
    %95 = vector.load %arg13[%c0_81, %c0_82] : memref<128x1024xf32, #tpu.memory_space<vmem>>, vector<128x1024xf32>
    %cst_83 = arith.constant dense<0.000000e+00> : vector<8x1024xf32>
    %96 = tpu.matmul %94, %95, %cst_83 {dimension_numbers = #tpu.dot_dimension_numbers<[1], [0], [0], [1], [0, 0, 1, 1], [], []>} : vector<8x128xf32>, vector<128x1024xf32>, vector<8x1024xf32> -> vector<8x1024xf32>
    %c0_84 = arith.constant 0 : index
    %c0_85 = arith.constant 0 : index
    %97 = vector.load %arg10[%c0_84, %c0_85] : memref<8x1024xf32, #tpu.memory_space<vmem>>, vector<8x1024xf32>
    tpu.vector_store %arg10[%c0_84, %c0_85], %96 {strides = array<i32>} : memref<8x1024xf32, #tpu.memory_space<vmem>>, vector<8x1024xf32>,
    %98 = tpu.iota {dimensions = array<i32: 1>} : vector<8x128xi32>
    %c4_i32 = arith.constant 4 : i32
    %99 = vector.broadcast %c4_i32 : i32 to vector<8x128xi32>
    %100 = arith.cmpi slt, %98, %99 : vector<8x128xi32>
    %101 = vector.extract_strided_slice %96 {offsets = [0, 128], sizes = [8, 128], strides = [1, 1]} : vector<8x1024xf32> to vector<8x128xf32>
    %cst_86 = arith.constant -1.000000e+30 : f32
    %102 = vector.broadcast %cst_86 : f32 to vector<8x128xf32>
    %103 = arith.select %100, %101, %102 : vector<8x128xi1>, vector<8x128xf32>
    %cst_87 = arith.constant dense<0xFF800000> : vector<8xf32>
    %104 = vector.multi_reduction <maximumf>, %103, %cst_87 [1] : vector<8x128xf32> to vector<8xf32>
    %105 = vector.shape_cast %104 : vector<8xf32> to vector<8x1xf32>
    %106 = vector.broadcast %105 : vector<8x1xf32> to vector<8x128xf32>
    %107 = arith.subf %103, %106 : vector<8x128xf32>
    %108 = math.exp %107 : vector<8x128xf32>
    %cst_88 = arith.constant dense<0.000000e+00> : vector<8xf32>
    %109 = vector.multi_reduction <add>, %108, %cst_88 [1] : vector<8x128xf32> to vector<8xf32>
    %110 = vector.shape_cast %109 : vector<8xf32> to vector<8x1xf32>
    %111 = vector.broadcast %110 : vector<8x1xf32> to vector<8x128xf32>
    %112 = arith.divf %108, %111 : vector<8x128xf32>
    %c0_89 = arith.constant 0 : index
    %c128 = arith.constant 128 : index
    %113 = vector.load %arg10[%c0_89, %c128] : memref<8x1024xf32, #tpu.memory_space<vmem>>, vector<8x128xf32>
    tpu.vector_store %arg10[%c0_89, %c128], %112 {strides = array<i32>} : memref<8x1024xf32, #tpu.memory_space<vmem>>, vector<8x128xf32>,
    %c4_i32_90 = arith.constant 4 : i32
    %114 = vector.broadcast %c4_i32_90 : i32 to vector<8x128xi32>
    %115 = arith.cmpi slt, %98, %114 : vector<8x128xi32>
    %116 = vector.extract_strided_slice %96 {offsets = [0, 384], sizes = [8, 128], strides = [1, 1]} : vector<8x1024xf32> to vector<8x128xf32>
    %cst_91 = arith.constant -1.000000e+30 : f32
    %117 = vector.broadcast %cst_91 : f32 to vector<8x128xf32>
    %118 = arith.select %115, %116, %117 : vector<8x128xi1>, vector<8x128xf32>
    %cst_92 = arith.constant dense<0xFF800000> : vector<8xf32>
    %119 = vector.multi_reduction <maximumf>, %118, %cst_92 [1] : vector<8x128xf32> to vector<8xf32>
    %120 = vector.shape_cast %119 : vector<8xf32> to vector<8x1xf32>
    %121 = vector.broadcast %120 : vector<8x1xf32> to vector<8x128xf32>
    %122 = arith.subf %118, %121 : vector<8x128xf32>
    %123 = math.exp %122 : vector<8x128xf32>
    %cst_93 = arith.constant dense<0.000000e+00> : vector<8xf32>
    %124 = vector.multi_reduction <add>, %123, %cst_93 [1] : vector<8x128xf32> to vector<8xf32>
    %125 = vector.shape_cast %124 : vector<8xf32> to vector<8x1xf32>
    %126 = vector.broadcast %125 : vector<8x1xf32> to vector<8x128xf32>
    %127 = arith.divf %123, %126 : vector<8x128xf32>
    %c0_94 = arith.constant 0 : index
    %c384 = arith.constant 384 : index
    %128 = vector.load %arg10[%c0_94, %c384] : memref<8x1024xf32, #tpu.memory_space<vmem>>, vector<8x128xf32>
    tpu.vector_store %arg10[%c0_94, %c384], %127 {strides = array<i32>} : memref<8x1024xf32, #tpu.memory_space<vmem>>, vector<8x128xf32>,
    %c4_i32_95 = arith.constant 4 : i32
    %129 = vector.broadcast %c4_i32_95 : i32 to vector<8x128xi32>
    %130 = arith.cmpi slt, %98, %129 : vector<8x128xi32>
    %131 = vector.extract_strided_slice %96 {offsets = [0, 640], sizes = [8, 128], strides = [1, 1]} : vector<8x1024xf32> to vector<8x128xf32>
    %cst_96 = arith.constant -1.000000e+30 : f32
    %132 = vector.broadcast %cst_96 : f32 to vector<8x128xf32>
    %133 = arith.select %130, %131, %132 : vector<8x128xi1>, vector<8x128xf32>
    %cst_97 = arith.constant dense<0xFF800000> : vector<8xf32>
    %134 = vector.multi_reduction <maximumf>, %133, %cst_97 [1] : vector<8x128xf32> to vector<8xf32>
    %135 = vector.shape_cast %134 : vector<8xf32> to vector<8x1xf32>
    %136 = vector.broadcast %135 : vector<8x1xf32> to vector<8x128xf32>
    %137 = arith.subf %133, %136 : vector<8x128xf32>
    %138 = math.exp %137 : vector<8x128xf32>
    %cst_98 = arith.constant dense<0.000000e+00> : vector<8xf32>
    %139 = vector.multi_reduction <add>, %138, %cst_98 [1] : vector<8x128xf32> to vector<8xf32>
    %140 = vector.shape_cast %139 : vector<8xf32> to vector<8x1xf32>
    %141 = vector.broadcast %140 : vector<8x1xf32> to vector<8x128xf32>
    %142 = arith.divf %138, %141 : vector<8x128xf32>
    %c0_99 = arith.constant 0 : index
    %c640 = arith.constant 640 : index
    %143 = vector.load %arg10[%c0_99, %c640] : memref<8x1024xf32, #tpu.memory_space<vmem>>, vector<8x128xf32>
    tpu.vector_store %arg10[%c0_99, %c640], %142 {strides = array<i32>} : memref<8x1024xf32, #tpu.memory_space<vmem>>, vector<8x128xf32>,
    %c4_i32_100 = arith.constant 4 : i32
    %144 = vector.broadcast %c4_i32_100 : i32 to vector<8x128xi32>
    %145 = arith.cmpi slt, %98, %144 : vector<8x128xi32>
    %146 = vector.extract_strided_slice %96 {offsets = [0, 896], sizes = [8, 128], strides = [1, 1]} : vector<8x1024xf32> to vector<8x128xf32>
    %cst_101 = arith.constant -1.000000e+30 : f32
    %147 = vector.broadcast %cst_101 : f32 to vector<8x128xf32>
    %148 = arith.select %145, %146, %147 : vector<8x128xi1>, vector<8x128xf32>
    %cst_102 = arith.constant dense<0xFF800000> : vector<8xf32>
    %149 = vector.multi_reduction <maximumf>, %148, %cst_102 [1] : vector<8x128xf32> to vector<8xf32>
    %150 = vector.shape_cast %149 : vector<8xf32> to vector<8x1xf32>
    %151 = vector.broadcast %150 : vector<8x1xf32> to vector<8x128xf32>
    %152 = arith.subf %148, %151 : vector<8x128xf32>
    %153 = math.exp %152 : vector<8x128xf32>
    %cst_103 = arith.constant dense<0.000000e+00> : vector<8xf32>
    %154 = vector.multi_reduction <add>, %153, %cst_103 [1] : vector<8x128xf32> to vector<8xf32>
    %155 = vector.shape_cast %154 : vector<8xf32> to vector<8x1xf32>
    %156 = vector.broadcast %155 : vector<8x1xf32> to vector<8x128xf32>
    %157 = arith.divf %153, %156 : vector<8x128xf32>
    %c0_104 = arith.constant 0 : index
    %c896 = arith.constant 896 : index
    %158 = vector.load %arg10[%c0_104, %c896] : memref<8x1024xf32, #tpu.memory_space<vmem>>, vector<8x128xf32>
    tpu.vector_store %arg10[%c0_104, %c896], %157 {strides = array<i32>} : memref<8x1024xf32, #tpu.memory_space<vmem>>, vector<8x128xf32>,
    return
  }
}

</mosaic_0001>

<llo_original>
// kernel: tpu_custom_call.1
$region0: #{tpu_custom_call.1}
  #allocation0 [shape = 'u32[]', space=smem, size = 0x4, offset = 0x4, fixed_abs, tag = 'smem constant byte address 0x4 - core index']
  #allocation1 [shape = 'u32[144,128]{1,0:T(1,128)}', space=vmem, size = 0x12000, scoped, tag = 'internal scratch']
  #allocation2 [shape = 'f32[16,128]{1,0:T(8,128)}', space=vmem, size = 0x2000, scoped, tag = 'scratch operand']
  #allocation3 [shape = 'f32[128,128]{1,0:T(8,128)}', space=vmem, size = 0x10000, scoped, tag = 'scratch operand']
  #allocation4 [shape = 'f32[128,1024]{1,0:T(8,128)}', space=vmem, size = 0x80000, scoped, tag = 'scratch operand']
  %s0 = inlined_call_operand.hbm [shape: f32[8,16], index: 0, kind: input, shape index: {}]
  %s1 = inlined_call_operand.hbm [shape: f32[16,32], index: 1, kind: input, shape index: {}]
  %s2 = inlined_call_operand.hbm [shape: f32[16,32], index: 2, kind: input, shape index: {}]
  %s3 = inlined_call_operand.hbm [shape: f32[4,16,32], index: 3, kind: input, shape index: {}]
  %s4 = inlined_call_operand.hbm [shape: f32[32,32], index: 4, kind: input, shape index: {}]
  %s5 = inlined_call_operand.hbm [shape: f32[32,32], index: 5, kind: input, shape index: {}]
  %s6 = inlined_call_operand.hbm [shape: f32[4,32,32], index: 6, kind: input, shape index: {}]
  %s7 = inlined_call_operand.hbm [shape: f32[32,256], index: 7, kind: input, shape index: {}]
  %s8 = inlined_call_operand.hbm [shape: f32[32,256], index: 8, kind: input, shape index: {}]
  %s9 = inlined_call_operand.hbm [shape: f32[4,32,256], index: 9, kind: input, shape index: {}]
  %s10 = inlined_call_operand.hbm [shape: f32[8,1024], index: 10, kind: output, shape index: {}]
  %s11 = sld [smem:[#allocation0]]
  $region90: #{tpu_custom_call.1} parent=0
    _
  %s13 = ssub.s32 1, %s11
  %s14 = scalar_select 0, %s13, %s11
  $region1: #{tpu_custom_call.1} parent=0
    #allocation5 [shape = 'u8[4096]{0}', space=vmem, size = 0x1000, scoped, tag = 'input window, operand 0, single buffered']
    #allocation6 [shape = 's32[1]{0}', space=sflag, size = 0x4, scoped, tag = 'scoped memory for tpu_custom_call.1']
    #allocation7 [shape = 's32[1]{0}', space=sflag, size = 0x4, scoped, tag = 'scoped memory for tpu_custom_call.1']
    #allocation8 [shape = 'u8[8192]{0}', space=vmem, size = 0x2000, scoped, tag = 'input window, operand 1, single buffered']
    #allocation9 [shape = 's32[1]{0}', space=sflag, size = 0x4, scoped, tag = 'scoped memory for tpu_custom_call.1']
    #allocation10 [shape = 'u8[8192]{0}', space=vmem, size = 0x2000, scoped, tag = 'input window, operand 2, single buffered']
    #allocation11 [shape = 'u8[32768]{0}', space=vmem, size = 0x8000, scoped, tag = 'input window, operand 3, single buffered']
    #allocation12 [shape = 's32[1]{0}', space=sflag, size = 0x4, scoped, tag = 'scoped memory for tpu_custom_call.1']
    #allocation13 [shape = 'u8[16384]{0}', space=vmem, size = 0x4000, scoped, tag = 'input window, operand 4, single buffered']
    #allocation14 [shape = 'u8[16384]{0}', space=vmem, size = 0x4000, scoped, tag = 'input window, operand 5, single buffered']
    #allocation15 [shape = 's32[1]{0}', space=sflag, size = 0x4, scoped, tag = 'scoped memory for tpu_custom_call.1']
    #allocation16 [shape = 'u8[65536]{0}', space=vmem, size = 0x10000, scoped, tag = 'input window, operand 6, single buffered']
    #allocation17 [shape = 'u8[32768]{0}', space=vmem, size = 0x8000, scoped, tag = 'input window, operand 7, single buffered']
    #allocation18 [shape = 's32[1]{0}', space=sflag, size = 0x4, scoped, tag = 'scoped memory for tpu_custom_call.1']
    #allocation19 [shape = 'u8[32768]{0}', space=vmem, size = 0x8000, scoped, tag = 'input window, operand 8, single buffered']
    #allocation20 [shape = 'u8[131072]{0}', space=vmem, size = 0x20000, scoped, tag = 'input window, operand 9, single buffered']
    #allocation21 [shape = 's32[1]{0}', space=sflag, size = 0x4, scoped, tag = 'scoped memory for tpu_custom_call.1']
    #allocation22 [shape = 'u8[32768]{0}', space=vmem, size = 0x8000, scoped, tag = 'output window, operand 0, single buffered']
    %15 = vsyncpa [#allocation6], 0
    %16 = vsyncpa [#allocation9], 0
    %17 = vsyncpa [#allocation12], 0
    %18 = vsyncpa [#allocation15], 0
    %19 = vsyncpa [#allocation18], 0
    %20 = vsyncpa [#allocation21], 0
    %21 = vsyncpa [#allocation7], 0
    // Predicated region
    $region2: #{tpu_custom_call.1} parent=1 // pred_check
      _
    $region3: #{tpu_custom_call.1} parent=1 // pred_check_branch
      %23 = sbr.rel (0) target = $region5
    $region4: #{tpu_custom_call.1} parent=1 // pred_region
      %s25 = ssub.s32 128, 128
      %26 = vsyncadd [#allocation6], %s25
      %s28 = sshll.u32 [#allocation5], 4
      %s29 = int_to_ptr.vmem [resolvable:$true] %s28
      %31 = dma.hbm_to_vmem [thread:$0]  %s0, 128, %s29, [#allocation6]
    $region5: #{tpu_custom_call.1} parent=1 // pred_fallthru
      _
    // Predicated region
    $region6: #{tpu_custom_call.1} parent=1 // pred_check
      _
    $region7: #{tpu_custom_call.1} parent=1 // pred_check_branch
      %33 = sbr.rel (0) target = $region9
    $region8: #{tpu_custom_call.1} parent=1 // pred_region
      %s35 = ssub.s32 256, 256
      %36 = vsyncadd [#allocation9], %s35
      %s37 = sshll.u32 [#allocation8], 4
      %s38 = int_to_ptr.vmem [resolvable:$true] %s37
      %43 = dma.hbm_to_vmem [thread:$0]  %s1, 256, %s38, [#allocation9], 128, 128, 8
    $region9: #{tpu_custom_call.1} parent=1 // pred_fallthru
      _
    // Predicated region
    $region10: #{tpu_custom_call.1} parent=1 // pred_check
      _
    $region11: #{tpu_custom_call.1} parent=1 // pred_check_branch
      %45 = sbr.rel (0) target = $region13
    $region12: #{tpu_custom_call.1} parent=1 // pred_region
      %s47 = ssub.s32 256, 256
      %48 = vsyncadd [#allocation9], %s47
      %s49 = sshll.u32 [#allocation10], 4
      %s50 = int_to_ptr.vmem [resolvable:$true] %s49
      %55 = dma.hbm_to_vmem [thread:$0]  %s2, 256, %s50, [#allocation9], 128, 128, 8
    $region13: #{tpu_custom_call.1} parent=1 // pred_fallthru
      _
    // Predicated region
    $region14: #{tpu_custom_call.1} parent=1 // pred_check
      _
    $region15: #{tpu_custom_call.1} parent=1 // pred_check_branch
      %57 = sbr.rel (0) target = $region17
    $region16: #{tpu_custom_call.1} parent=1 // pred_region
      %s59 = ssub.s32 1024, 1024
      %60 = vsyncadd [#allocation12], %s59
      %s61 = sshll.u32 [#allocation11], 4
      %s62 = int_to_ptr.vmem [resolvable:$true] %s61
      %67 = dma.hbm_to_vmem [thread:$0]  %s3, 1024, %s62, [#allocation12], 128, 128, 8
    $region17: #{tpu_custom_call.1} parent=1 // pred_fallthru
      _
    // Predicated region
    $region18: #{tpu_custom_call.1} parent=1 // pred_check
      _
    $region19: #{tpu_custom_call.1} parent=1 // pred_check_branch
      %69 = sbr.rel (0) target = $region21
    $region20: #{tpu_custom_call.1} parent=1 // pred_region
      %s71 = ssub.s32 512, 512
      %72 = vsyncadd [#allocation12], %s71
      %s73 = sshll.u32 [#allocation13], 4
      %s74 = int_to_ptr.vmem [resolvable:$true] %s73
      %79 = dma.hbm_to_vmem [thread:$0]  %s4, 512, %s74, [#allocation12], 128, 128, 8
    $region21: #{tpu_custom_call.1} parent=1 // pred_fallthru
      _
    // Predicated region
    $region22: #{tpu_custom_call.1} parent=1 // pred_check
      _
    $region23: #{tpu_custom_call.1} parent=1 // pred_check_branch
      %81 = sbr.rel (0) target = $region25
    $region24: #{tpu_custom_call.1} parent=1 // pred_region
      %s83 = ssub.s32 512, 512
      %84 = vsyncadd [#allocation15], %s83
      %s85 = sshll.u32 [#allocation14], 4
      %s86 = int_to_ptr.vmem [resolvable:$true] %s85
      %91 = dma.hbm_to_vmem [thread:$0]  %s5, 512, %s86, [#allocation15], 128, 128, 8
    $region25: #{tpu_custom_call.1} parent=1 // pred_fallthru
      _
    // Predicated region
    $region26: #{tpu_custom_call.1} parent=1 // pred_check
      _
    $region27: #{tpu_custom_call.1} parent=1 // pred_check_branch
      %93 = sbr.rel (0) target = $region29
    $region28: #{tpu_custom_call.1} parent=1 // pred_region
      %s95 = ssub.s32 2048, 2048
      %96 = vsyncadd [#allocation15], %s95
      %s97 = sshll.u32 [#allocation16], 4
      %s98 = int_to_ptr.vmem [resolvable:$true] %s97
      %103 = dma.hbm_to_vmem [thread:$0]  %s6, 2048, %s98, [#allocation15], 128, 128, 8
    $region29: #{tpu_custom_call.1} parent=1 // pred_fallthru
      _
    // Predicated region
    $region30: #{tpu_custom_call.1} parent=1 // pred_check
      _
    $region31: #{tpu_custom_call.1} parent=1 // pred_check_branch
      %105 = sbr.rel (0) target = $region33
    $region32: #{tpu_custom_call.1} parent=1 // pred_region
      %s107 = ssub.s32 1024, 1024
      %108 = vsyncadd [#allocation18], %s107
      %s109 = sshll.u32 [#allocation17], 4
      %s110 = int_to_ptr.vmem [resolvable:$true] %s109
      %115 = dma.hbm_to_vmem [thread:$0]  %s7, 1024, %s110, [#allocation18], 256, 256, 16
    $region33: #{tpu_custom_call.1} parent=1 // pred_fallthru
      _
    // Predicated region
    $region34: #{tpu_custom_call.1} parent=1 // pred_check
      _
    $region35: #{tpu_custom_call.1} parent=1 // pred_check_branch
      %117 = sbr.rel (0) target = $region37
    $region36: #{tpu_custom_call.1} parent=1 // pred_region
      %s119 = ssub.s32 1024, 1024
      %120 = vsyncadd [#allocation18], %s119
      %s121 = sshll.u32 [#allocation19], 4
      %s122 = int_to_ptr.vmem [resolvable:$true] %s121
      %127 = dma.hbm_to_vmem [thread:$0]  %s8, 1024, %s122, [#allocation18], 256, 256, 16
    $region37: #{tpu_custom_call.1} parent=1 // pred_fallthru
      _
    // Predicated region
    $region38: #{tpu_custom_call.1} parent=1 // pred_check
      _
    $region39: #{tpu_custom_call.1} parent=1 // pred_check_branch
      %129 = sbr.rel (0) target = $region41
    $region40: #{tpu_custom_call.1} parent=1 // pred_region
      %s131 = ssub.s32 4096, 4096
      %132 = vsyncadd [#allocation21], %s131
      %s133 = sshll.u32 [#allocation20], 4
      %s134 = int_to_ptr.vmem [resolvable:$true] %s133
      %139 = dma.hbm_to_vmem [thread:$0]  %s9, 4096, %s134, [#allocation21], 256, 256, 16
    $region41: #{tpu_custom_call.1} parent=1 // pred_fallthru
      _
    // Predicated region
    $region42: #{tpu_custom_call.1} parent=1 // pred_check
      _
    $region43: #{tpu_custom_call.1} parent=1 // pred_check_branch
      %141 = sbr.rel (0) target = $region45
    $region44: #{tpu_custom_call.1} parent=1 // pred_region
      %142 = dma.done [#allocation6], 128
    $region45: #{tpu_custom_call.1} parent=1 // pred_fallthru
      _
    // Predicated region
    $region46: #{tpu_custom_call.1} parent=1 // pred_check
      _
    $region47: #{tpu_custom_call.1} parent=1 // pred_check_branch
      %144 = sbr.rel (0) target = $region49
    $region48: #{tpu_custom_call.1} parent=1 // pred_region
      %145 = dma.done [#allocation9], 256
    $region49: #{tpu_custom_call.1} parent=1 // pred_fallthru
      _
    // Predicated region
    $region50: #{tpu_custom_call.1} parent=1 // pred_check
      _
    $region51: #{tpu_custom_call.1} parent=1 // pred_check_branch
      %147 = sbr.rel (0) target = $region53
    $region52: #{tpu_custom_call.1} parent=1 // pred_region
      %148 = dma.done [#allocation9], 256
    $region53: #{tpu_custom_call.1} parent=1 // pred_fallthru
      _
    // Predicated region
    $region54: #{tpu_custom_call.1} parent=1 // pred_check
      _
    $region55: #{tpu_custom_call.1} parent=1 // pred_check_branch
      %150 = sbr.rel (0) target = $region57
    $region56: #{tpu_custom_call.1} parent=1 // pred_region
      %151 = dma.done [#allocation12], 1024
    $region57: #{tpu_custom_call.1} parent=1 // pred_fallthru
      _
    // Predicated region
    $region58: #{tpu_custom_call.1} parent=1 // pred_check
      _
    $region59: #{tpu_custom_call.1} parent=1 // pred_check_branch
      %153 = sbr.rel (0) target = $region61
    $region60: #{tpu_custom_call.1} parent=1 // pred_region
      %154 = dma.done [#allocation12], 512
    $region61: #{tpu_custom_call.1} parent=1 // pred_fallthru
      _
    // Predicated region
    $region62: #{tpu_custom_call.1} parent=1 // pred_check
      _
    $region63: #{tpu_custom_call.1} parent=1 // pred_check_branch
      %156 = sbr.rel (0) target = $region65
    $region64: #{tpu_custom_call.1} parent=1 // pred_region
      %157 = dma.done [#allocation15], 512
    $region65: #{tpu_custom_call.1} parent=1 // pred_fallthru
      _
    // Predicated region
    $region66: #{tpu_custom_call.1} parent=1 // pred_check
      _
    $region67: #{tpu_custom_call.1} parent=1 // pred_check_branch
      %159 = sbr.rel (0) target = $region69
    $region68: #{tpu_custom_call.1} parent=1 // pred_region
      %160 = dma.done [#allocation15], 2048
    $region69: #{tpu_custom_call.1} parent=1 // pred_fallthru
      _
    // Predicated region
    $region70: #{tpu_custom_call.1} parent=1 // pred_check
      _
    $region71: #{tpu_custom_call.1} parent=1 // pred_check_branch
      %162 = sbr.rel (0) target = $region73
    $region72: #{tpu_custom_call.1} parent=1 // pred_region
      %163 = dma.done [#allocation18], 1024
    $region73: #{tpu_custom_call.1} parent=1 // pred_fallthru
      _
    // Predicated region
    $region74: #{tpu_custom_call.1} parent=1 // pred_check
      _
    $region75: #{tpu_custom_call.1} parent=1 // pred_check_branch
      %165 = sbr.rel (0) target = $region77
    $region76: #{tpu_custom_call.1} parent=1 // pred_region
      %166 = dma.done [#allocation18], 1024
    $region77: #{tpu_custom_call.1} parent=1 // pred_fallthru
      _
    // Predicated region
    $region78: #{tpu_custom_call.1} parent=1 // pred_check
      _
    $region79: #{tpu_custom_call.1} parent=1 // pred_check_branch
      %168 = sbr.rel (0) target = $region81
    $region80: #{tpu_custom_call.1} parent=1 // pred_region
      %169 = dma.done [#allocation21], 4096
    $region81: #{tpu_custom_call.1} parent=1 // pred_fallthru
      _
    %v170 = vld [vmem:[#allocation8] sm:$0xff]
    %v171 = vld [vmem:[#allocation8 + $0x8] sm:$0xff]
    %v172 = vld [vmem:[#allocation10] sm:$0xff]
    %v173 = vld [vmem:[#allocation10 + $0x8] sm:$0xff]
    %v174 = vld [vmem:[#allocation13] sm:$0xff]
    %v175 = vld [vmem:[#allocation13 + $0x8] sm:$0xff]
    %v176 = vld [vmem:[#allocation13 + $0x10] sm:$0xff]
    %v177 = vld [vmem:[#allocation13 + $0x18] sm:$0xff]
    %v178 = vld [vmem:[#allocation14] sm:$0xff]
    %v179 = vld [vmem:[#allocation14 + $0x8] sm:$0xff]
    %v180 = vld [vmem:[#allocation14 + $0x10] sm:$0xff]
    %v181 = vld [vmem:[#allocation14 + $0x18] sm:$0xff]
    %v182 = vld [vmem:[#allocation17] sm:$0xff]
    %v183 = vld [vmem:[#allocation17 + $0x8] sm:$0xff]
    %v184 = vld [vmem:[#allocation17 + $0x10] sm:$0xff]
    %v185 = vld [vmem:[#allocation17 + $0x18] sm:$0xff]
    %v186 = vld [vmem:[#allocation17 + $0x20] sm:$0xff]
    %v187 = vld [vmem:[#allocation17 + $0x28] sm:$0xff]
    %v188 = vld [vmem:[#allocation17 + $0x30] sm:$0xff]
    %v189 = vld [vmem:[#allocation17 + $0x38] sm:$0xff]
    %v190 = vld [vmem:[#allocation19] sm:$0xff]
    %v191 = vld [vmem:[#allocation19 + $0x8] sm:$0xff]
    %v192 = vld [vmem:[#allocation19 + $0x10] sm:$0xff]
    %v193 = vld [vmem:[#allocation19 + $0x18] sm:$0xff]
    %v194 = vld [vmem:[#allocation19 + $0x20] sm:$0xff]
    %v195 = vld [vmem:[#allocation19 + $0x28] sm:$0xff]
    %v196 = vld [vmem:[#allocation19 + $0x30] sm:$0xff]
    %v197 = vld [vmem:[#allocation19 + $0x38] sm:$0xff]
    %198 = vst [vmem:[#allocation3] sm:$0xff] 0.0
    %199 = vst [vmem:[#allocation3 + $0x8] sm:$0xff] 0.0
    %200 = vst [vmem:[#allocation3 + $0x10] sm:$0xff] 0.0
    %201 = vst [vmem:[#allocation3 + $0x18] sm:$0xff] 0.0
    %202 = vst [vmem:[#allocation3 + $0x20] sm:$0xff] 0.0
    %203 = vst [vmem:[#allocation3 + $0x28] sm:$0xff] 0.0
    %204 = vst [vmem:[#allocation3 + $0x30] sm:$0xff] 0.0
    %205 = vst [vmem:[#allocation3 + $0x38] sm:$0xff] 0.0
    %206 = vst [vmem:[#allocation3 + $0x40] sm:$0xff] 0.0
    %207 = vst [vmem:[#allocation3 + $0x48] sm:$0xff] 0.0
    %208 = vst [vmem:[#allocation3 + $0x50] sm:$0xff] 0.0
    %209 = vst [vmem:[#allocation3 + $0x58] sm:$0xff] 0.0
    %210 = vst [vmem:[#allocation3 + $0x60] sm:$0xff] 0.0
    %211 = vst [vmem:[#allocation3 + $0x68] sm:$0xff] 0.0
    %212 = vst [vmem:[#allocation3 + $0x70] sm:$0xff] 0.0
    %213 = vst [vmem:[#allocation3 + $0x78] sm:$0xff] 0.0
    %214 = vst [vmem:[#allocation4] sm:$0xff] 0.0
    %215 = vst [vmem:[#allocation4 + $0x8] sm:$0xff] 0.0
    %216 = vst [vmem:[#allocation4 + $0x10] sm:$0xff] 0.0
    %217 = vst [vmem:[#allocation4 + $0x18] sm:$0xff] 0.0
    %218 = vst [vmem:[#allocation4 + $0x20] sm:$0xff] 0.0
    %219 = vst [vmem:[#allocation4 + $0x28] sm:$0xff] 0.0
    %220 = vst [vmem:[#allocation4 + $0x30] sm:$0xff] 0.0
    %221 = vst [vmem:[#allocation4 + $0x38] sm:$0xff] 0.0
    %222 = vst [vmem:[#allocation4 + $0x40] sm:$0xff] 0.0
    %223 = vst [vmem:[#allocation4 + $0x48] sm:$0xff] 0.0
    %224 = vst [vmem:[#allocation4 + $0x50] sm:$0xff] 0.0
    %225 = vst [vmem:[#allocation4 + $0x58] sm:$0xff] 0.0
    %226 = vst [vmem:[#allocation4 + $0x60] sm:$0xff] 0.0
    %227 = vst [vmem:[#allocation4 + $0x68] sm:$0xff] 0.0
    %228 = vst [vmem:[#allocation4 + $0x70] sm:$0xff] 0.0
    %229 = vst [vmem:[#allocation4 + $0x78] sm:$0xff] 0.0
    %230 = vst [vmem:[#allocation4 + $0x80] sm:$0xff] 0.0
    %231 = vst [vmem:[#allocation4 + $0x88] sm:$0xff] 0.0
    %232 = vst [vmem:[#allocation4 + $0x90] sm:$0xff] 0.0
    %233 = vst [vmem:[#allocation4 + $0x98] sm:$0xff] 0.0
    %234 = vst [vmem:[#allocation4 + $0xa0] sm:$0xff] 0.0
    %235 = vst [vmem:[#allocation4 + $0xa8] sm:$0xff] 0.0
    %236 = vst [vmem:[#allocation4 + $0xb0] sm:$0xff] 0.0
    %237 = vst [vmem:[#allocation4 + $0xb8] sm:$0xff] 0.0
    %238 = vst [vmem:[#allocation4 + $0xc0] sm:$0xff] 0.0
    %239 = vst [vmem:[#allocation4 + $0xc8] sm:$0xff] 0.0
    %240 = vst [vmem:[#allocation4 + $0xd0] sm:$0xff] 0.0
    %241 = vst [vmem:[#allocation4 + $0xd8] sm:$0xff] 0.0
    %242 = vst [vmem:[#allocation4 + $0xe0] sm:$0xff] 0.0
    %243 = vst [vmem:[#allocation4 + $0xe8] sm:$0xff] 0.0
    %244 = vst [vmem:[#allocation4 + $0xf0] sm:$0xff] 0.0
    %245 = vst [vmem:[#allocation4 + $0xf8] sm:$0xff] 0.0
    %246 = vst [vmem:[#allocation4 + $0x100] sm:$0xff] 0.0
    %247 = vst [vmem:[#allocation4 + $0x108] sm:$0xff] 0.0
    %248 = vst [vmem:[#allocation4 + $0x110] sm:$0xff] 0.0
    %249 = vst [vmem:[#allocation4 + $0x118] sm:$0xff] 0.0
    %250 = vst [vmem:[#allocation4 + $0x120] sm:$0xff] 0.0
    %251 = vst [vmem:[#allocation4 + $0x128] sm:$0xff] 0.0
    %252 = vst [vmem:[#allocation4 + $0x130] sm:$0xff] 0.0
    %253 = vst [vmem:[#allocation4 + $0x138] sm:$0xff] 0.0
    %254 = vst [vmem:[#allocation4 + $0x140] sm:$0xff] 0.0
    %255 = vst [vmem:[#allocation4 + $0x148] sm:$0xff] 0.0
    %256 = vst [vmem:[#allocation4 + $0x150] sm:$0xff] 0.0
    %257 = vst [vmem:[#allocation4 + $0x158] sm:$0xff] 0.0
    %258 = vst [vmem:[#allocation4 + $0x160] sm:$0xff] 0.0
    %259 = vst [vmem:[#allocation4 + $0x168] sm:$0xff] 0.0
    %260 = vst [vmem:[#allocation4 + $0x170] sm:$0xff] 0.0
    %261 = vst [vmem:[#allocation4 + $0x178] sm:$0xff] 0.0
    %262 = vst [vmem:[#allocation4 + $0x180] sm:$0xff] 0.0
    %263 = vst [vmem:[#allocation4 + $0x188] sm:$0xff] 0.0
    %264 = vst [vmem:[#allocation4 + $0x190] sm:$0xff] 0.0
    %265 = vst [vmem:[#allocation4 + $0x198] sm:$0xff] 0.0
    %266 = vst [vmem:[#allocation4 + $0x1a0] sm:$0xff] 0.0
    %267 = vst [vmem:[#allocation4 + $0x1a8] sm:$0xff] 0.0
    %268 = vst [vmem:[#allocation4 + $0x1b0] sm:$0xff] 0.0
    %269 = vst [vmem:[#allocation4 + $0x1b8] sm:$0xff] 0.0
    %270 = vst [vmem:[#allocation4 + $0x1c0] sm:$0xff] 0.0
    %271 = vst [vmem:[#allocation4 + $0x1c8] sm:$0xff] 0.0
    %272 = vst [vmem:[#allocation4 + $0x1d0] sm:$0xff] 0.0
    %273 = vst [vmem:[#allocation4 + $0x1d8] sm:$0xff] 0.0
    %274 = vst [vmem:[#allocation4 + $0x1e0] sm:$0xff] 0.0
    %275 = vst [vmem:[#allocation4 + $0x1e8] sm:$0xff] 0.0
    %276 = vst [vmem:[#allocation4 + $0x1f0] sm:$0xff] 0.0
    %277 = vst [vmem:[#allocation4 + $0x1f8] sm:$0xff] 0.0
    %278 = vst [vmem:[#allocation4 + $0x200] sm:$0xff] 0.0
    %279 = vst [vmem:[#allocation4 + $0x208] sm:$0xff] 0.0
    %280 = vst [vmem:[#allocation4 + $0x210] sm:$0xff] 0.0
    %281 = vst [vmem:[#allocation4 + $0x218] sm:$0xff] 0.0
    %282 = vst [vmem:[#allocation4 + $0x220] sm:$0xff] 0.0
    %283 = vst [vmem:[#allocation4 + $0x228] sm:$0xff] 0.0
    %284 = vst [vmem:[#allocation4 + $0x230] sm:$0xff] 0.0
    %285 = vst [vmem:[#allocation4 + $0x238] sm:$0xff] 0.0
    %286 = vst [vmem:[#allocation4 + $0x240] sm:$0xff] 0.0
    %287 = vst [vmem:[#allocation4 + $0x248] sm:$0xff] 0.0
    %288 = vst [vmem:[#allocation4 + $0x250] sm:$0xff] 0.0
    %289 = vst [vmem:[#allocation4 + $0x258] sm:$0xff] 0.0
    %290 = vst [vmem:[#allocation4 + $0x260] sm:$0xff] 0.0
    %291 = vst [vmem:[#allocation4 + $0x268] sm:$0xff] 0.0
    %292 = vst [vmem:[#allocation4 + $0x270] sm:$0xff] 0.0
    %293 = vst [vmem:[#allocation4 + $0x278] sm:$0xff] 0.0
    %294 = vst [vmem:[#allocation4 + $0x280] sm:$0xff] 0.0
    %295 = vst [vmem:[#allocation4 + $0x288] sm:$0xff] 0.0
    %296 = vst [vmem:[#allocation4 + $0x290] sm:$0xff] 0.0
    %297 = vst [vmem:[#allocation4 + $0x298] sm:$0xff] 0.0
    %298 = vst [vmem:[#allocation4 + $0x2a0] sm:$0xff] 0.0
    %299 = vst [vmem:[#allocation4 + $0x2a8] sm:$0xff] 0.0
    %300 = vst [vmem:[#allocation4 + $0x2b0] sm:$0xff] 0.0
    %301 = vst [vmem:[#allocation4 + $0x2b8] sm:$0xff] 0.0
    %302 = vst [vmem:[#allocation4 + $0x2c0] sm:$0xff] 0.0
    %303 = vst [vmem:[#allocation4 + $0x2c8] sm:$0xff] 0.0
    %304 = vst [vmem:[#allocation4 + $0x2d0] sm:$0xff] 0.0
    %305 = vst [vmem:[#allocation4 + $0x2d8] sm:$0xff] 0.0
    %306 = vst [vmem:[#allocation4 + $0x2e0] sm:$0xff] 0.0
    %307 = vst [vmem:[#allocation4 + $0x2e8] sm:$0xff] 0.0
    %308 = vst [vmem:[#allocation4 + $0x2f0] sm:$0xff] 0.0
    %309 = vst [vmem:[#allocation4 + $0x2f8] sm:$0xff] 0.0
    %310 = vst [vmem:[#allocation4 + $0x300] sm:$0xff] 0.0
    %311 = vst [vmem:[#allocation4 + $0x308] sm:$0xff] 0.0
    %312 = vst [vmem:[#allocation4 + $0x310] sm:$0xff] 0.0
    %313 = vst [vmem:[#allocation4 + $0x318] sm:$0xff] 0.0
    %314 = vst [vmem:[#allocation4 + $0x320] sm:$0xff] 0.0
    %315 = vst [vmem:[#allocation4 + $0x328] sm:$0xff] 0.0
    %316 = vst [vmem:[#allocation4 + $0x330] sm:$0xff] 0.0
    %317 = vst [vmem:[#allocation4 + $0x338] sm:$0xff] 0.0
    %318 = vst [vmem:[#allocation4 + $0x340] sm:$0xff] 0.0
    %319 = vst [vmem:[#allocation4 + $0x348] sm:$0xff] 0.0
    %320 = vst [vmem:[#allocation4 + $0x350] sm:$0xff] 0.0
    %321 = vst [vmem:[#allocation4 + $0x358] sm:$0xff] 0.0
    %322 = vst [vmem:[#allocation4 + $0x360] sm:$0xff] 0.0
    %323 = vst [vmem:[#allocation4 + $0x368] sm:$0xff] 0.0
    %324 = vst [vmem:[#allocation4 + $0x370] sm:$0xff] 0.0
    %325 = vst [vmem:[#allocation4 + $0x378] sm:$0xff] 0.0
    %326 = vst [vmem:[#allocation4 + $0x380] sm:$0xff] 0.0
    %327 = vst [vmem:[#allocation4 + $0x388] sm:$0xff] 0.0
    %328 = vst [vmem:[#allocation4 + $0x390] sm:$0xff] 0.0
    %329 = vst [vmem:[#allocation4 + $0x398] sm:$0xff] 0.0
    %330 = vst [vmem:[#allocation4 + $0x3a0] sm:$0xff] 0.0
    %331 = vst [vmem:[#allocation4 + $0x3a8] sm:$0xff] 0.0
    %332 = vst [vmem:[#allocation4 + $0x3b0] sm:$0xff] 0.0
    %333 = vst [vmem:[#allocation4 + $0x3b8] sm:$0xff] 0.0
    %334 = vst [vmem:[#allocation4 + $0x3c0] sm:$0xff] 0.0
    %335 = vst [vmem:[#allocation4 + $0x3c8] sm:$0xff] 0.0
    %336 = vst [vmem:[#allocation4 + $0x3d0] sm:$0xff] 0.0
    %337 = vst [vmem:[#allocation4 + $0x3d8] sm:$0xff] 0.0
    %338 = vst [vmem:[#allocation4 + $0x3e0] sm:$0xff] 0.0
    %339 = vst [vmem:[#allocation4 + $0x3e8] sm:$0xff] 0.0
    %340 = vst [vmem:[#allocation4 + $0x3f0] sm:$0xff] 0.0
    %341 = vst [vmem:[#allocation4 + $0x3f8] sm:$0xff] 0.0
    %v342 = vld [vmem:[#allocation11] sm:$0xff]
    %v343 = vld [vmem:[#allocation11 + $0x8] sm:$0xff]
    %v344 = vmul.f32 %v172, %v342
    %v345 = vmul.f32 %v173, %v343
    %v346 = vadd.f32 %v170, %v344
    %v347 = vadd.f32 %v171, %v345
    %vm348 = vcmask 261120
    %349 = vst.msk [vmem:[#allocation2] sm:$0xff] %vm348, %v346
    %350 = vst.msk [vmem:[#allocation2 + $0x8] sm:$0xff] %vm348, %v347
    %v351 = vld [vmem:[#allocation16] sm:$0xff]
    %v352 = vld [vmem:[#allocation16 + $0x8] sm:$0xff]
    %v353 = vld [vmem:[#allocation16 + $0x10] sm:$0xff]
    %v354 = vld [vmem:[#allocation16 + $0x18] sm:$0xff]
    %v355 = vmul.f32 %v178, %v351
    %v356 = vmul.f32 %v179, %v352
    %v357 = vmul.f32 %v180, %v353
    %v358 = vmul.f32 %v181, %v354
    %v359 = vadd.f32 %v174, %v355
    %v360 = vadd.f32 %v175, %v356
    %v361 = vadd.f32 %v176, %v357
    %v362 = vadd.f32 %v177, %v358
    %363 = vst.msk [vmem:[#allocation3] sm:$0xff] %vm348, %v359
    %364 = vst.msk [vmem:[#allocation3 + $0x8] sm:$0xff] %vm348, %v360
    %365 = vst.msk [vmem:[#allocation3 + $0x10] sm:$0xff] %vm348, %v361
    %366 = vst.msk [vmem:[#allocation3 + $0x18] sm:$0xff] %vm348, %v362
    %v367 = vld [vmem:[#allocation20] sm:$0xff]
    %v368 = vld [vmem:[#allocation20 + $0x8] sm:$0xff]
    %v369 = vld [vmem:[#allocation20 + $0x10] sm:$0xff]
    %v370 = vld [vmem:[#allocation20 + $0x18] sm:$0xff]
    %v371 = vld [vmem:[#allocation20 + $0x20] sm:$0xff]
    %v372 = vld [vmem:[#allocation20 + $0x28] sm:$0xff]
    %v373 = vld [vmem:[#allocation20 + $0x30] sm:$0xff]
    %v374 = vld [vmem:[#allocation20 + $0x38] sm:$0xff]
    %v375 = vmul.f32 %v190, %v367
    %v376 = vmul.f32 %v191, %v368
    %v377 = vmul.f32 %v192, %v369
    %v378 = vmul.f32 %v193, %v370
    %v379 = vmul.f32 %v194, %v371
    %v380 = vmul.f32 %v195, %v372
    %v381 = vmul.f32 %v196, %v373
    %v382 = vmul.f32 %v197, %v374
    %v383 = vadd.f32 %v182, %v375
    %v384 = vadd.f32 %v183, %v376
    %v385 = vadd.f32 %v184, %v377
    %v386 = vadd.f32 %v185, %v378
    %v387 = vadd.f32 %v186, %v379
    %v388 = vadd.f32 %v187, %v380
    %v389 = vadd.f32 %v188, %v381
    %v390 = vadd.f32 %v189, %v382
    %391 = vst [vmem:[#allocation4] sm:$0xff] %v383
    %392 = vst [vmem:[#allocation4 + $0x8] sm:$0xff] %v384
    %393 = vst [vmem:[#allocation4 + $0x40] sm:$0xff] %v385
    %394 = vst [vmem:[#allocation4 + $0x48] sm:$0xff] %v386
    %395 = vst [vmem:[#allocation4 + $0x80] sm:$0xff] %v387
    %396 = vst [vmem:[#allocation4 + $0x88] sm:$0xff] %v388
    %397 = vst [vmem:[#allocation4 + $0xc0] sm:$0xff] %v389
    %398 = vst [vmem:[#allocation4 + $0xc8] sm:$0xff] %v390
    %s399 = scalar_lea.vmem [#allocation11], 16
    %v400 = vld [vmem:[%s399] sm:$0xff]
    %v401 = vld [vmem:[%s399 + $0x8] sm:$0xff]
    %v402 = vmul.f32 %v172, %v400
    %v403 = vmul.f32 %v173, %v401
    %v404 = vadd.f32 %v170, %v402
    %v405 = vadd.f32 %v171, %v403
    %408 = vrot.lane.b32.xlu0 %v404, 32
    %v409 = vpop.permute.xlu0 %408
    %410 = vrot.lane.b32.xlu0 %v405, 32
    %v411 = vpop.permute.xlu0 %410
    %vm414 = vcmask 523520
    %415 = vst.msk [vmem:[#allocation2] sm:$0xff] %vm414, %v409
    %416 = vst.msk [vmem:[#allocation2 + $0x8] sm:$0xff] %vm414, %v411
    %s417 = scalar_lea.vmem [#allocation16], 32
    %v418 = vld [vmem:[%s417] sm:$0xff]
    %v419 = vld [vmem:[%s417 + $0x8] sm:$0xff]
    %v420 = vld [vmem:[%s417 + $0x10] sm:$0xff]
    %v421 = vld [vmem:[%s417 + $0x18] sm:$0xff]
    %v422 = vmul.f32 %v178, %v418
    %v423 = vmul.f32 %v179, %v419
    %v424 = vmul.f32 %v180, %v420
    %v425 = vmul.f32 %v181, %v421
    %v426 = vadd.f32 %v174, %v422
    %v427 = vadd.f32 %v175, %v423
    %v428 = vadd.f32 %v176, %v424
    %v429 = vadd.f32 %v177, %v425
    %434 = vrot.lane.b32.xlu0 %v426, 32
    %v435 = vpop.permute.xlu0 %434
    %436 = vrot.lane.b32.xlu0 %v427, 32
    %v437 = vpop.permute.xlu0 %436
    %438 = vrot.lane.b32.xlu0 %v428, 32
    %v439 = vpop.permute.xlu0 %438
    %440 = vrot.lane.b32.xlu0 %v429, 32
    %v441 = vpop.permute.xlu0 %440
    %446 = vst.msk [vmem:[#allocation3 + $0x20] sm:$0xff] %vm414, %v435
    %447 = vst.msk [vmem:[#allocation3 + $0x28] sm:$0xff] %vm414, %v437
    %448 = vst.msk [vmem:[#allocation3 + $0x30] sm:$0xff] %vm414, %v439
    %449 = vst.msk [vmem:[#allocation3 + $0x38] sm:$0xff] %vm414, %v441
    %s450 = scalar_lea.vmem [#allocation20], 64
    %v451 = vld [vmem:[%s450] sm:$0xff]
    %v452 = vld [vmem:[%s450 + $0x8] sm:$0xff]
    %v453 = vld [vmem:[%s450 + $0x10] sm:$0xff]
    %v454 = vld [vmem:[%s450 + $0x18] sm:$0xff]
    %v455 = vld [vmem:[%s450 + $0x20] sm:$0xff]
    %v456 = vld [vmem:[%s450 + $0x28] sm:$0xff]
    %v457 = vld [vmem:[%s450 + $0x30] sm:$0xff]
    %v458 = vld [vmem:[%s450 + $0x38] sm:$0xff]
    %v459 = vmul.f32 %v190, %v451
    %v460 = vmul.f32 %v191, %v452
    %v461 = vmul.f32 %v192, %v453
    %v462 = vmul.f32 %v193, %v454
    %v463 = vmul.f32 %v194, %v455
    %v464 = vmul.f32 %v195, %v456
    %v465 = vmul.f32 %v196, %v457
    %v466 = vmul.f32 %v197, %v458
    %v467 = vadd.f32 %v182, %v459
    %v468 = vadd.f32 %v183, %v460
    %v469 = vadd.f32 %v184, %v461
    %v470 = vadd.f32 %v185, %v462
    %v471 = vadd.f32 %v186, %v463
    %v472 = vadd.f32 %v187, %v464
    %v473 = vadd.f32 %v188, %v465
    %v474 = vadd.f32 %v189, %v466
    %475 = vst [vmem:[#allocation4 + $0x110] sm:$0xff] %v467
    %476 = vst [vmem:[#allocation4 + $0x118] sm:$0xff] %v468
    %477 = vst [vmem:[#allocation4 + $0x150] sm:$0xff] %v469
    %478 = vst [vmem:[#allocation4 + $0x158] sm:$0xff] %v470
    %479 = vst [vmem:[#allocation4 + $0x190] sm:$0xff] %v471
    %480 = vst [vmem:[#allocation4 + $0x198] sm:$0xff] %v472
    %481 = vst [vmem:[#allocation4 + $0x1d0] sm:$0xff] %v473
    %482 = vst [vmem:[#allocation4 + $0x1d8] sm:$0xff] %v474
    %s483 = scalar_lea.vmem [#allocation11], 32
    %v484 = vld [vmem:[%s483] sm:$0xff]
    %v485 = vld [vmem:[%s483 + $0x8] sm:$0xff]
    %v486 = vmul.f32 %v172, %v484
    %v487 = vmul.f32 %v173, %v485
    %v488 = vadd.f32 %v170, %v486
    %v489 = vadd.f32 %v171, %v487
    %492 = vrot.lane.b32.xlu0 %v488, 64
    %v493 = vpop.permute.xlu0 %492
    %494 = vrot.lane.b32.xlu0 %v489, 64
    %v495 = vpop.permute.xlu0 %494
    %vm498 = vcmask 785920
    %499 = vst.msk [vmem:[#allocation2] sm:$0xff] %vm498, %v493
    %500 = vst.msk [vmem:[#allocation2 + $0x8] sm:$0xff] %vm498, %v495
    %s501 = scalar_lea.vmem [#allocation16], 64
    %v502 = vld [vmem:[%s501] sm:$0xff]
    %v503 = vld [vmem:[%s501 + $0x8] sm:$0xff]
    %v504 = vld [vmem:[%s501 + $0x10] sm:$0xff]
    %v505 = vld [vmem:[%s501 + $0x18] sm:$0xff]
    %v506 = vmul.f32 %v178, %v502
    %v507 = vmul.f32 %v179, %v503
    %v508 = vmul.f32 %v180, %v504
    %v509 = vmul.f32 %v181, %v505
    %v510 = vadd.f32 %v174, %v506
    %v511 = vadd.f32 %v175, %v507
    %v512 = vadd.f32 %v176, %v508
    %v513 = vadd.f32 %v177, %v509
    %518 = vrot.lane.b32.xlu0 %v510, 64
    %v519 = vpop.permute.xlu0 %518
    %520 = vrot.lane.b32.xlu0 %v511, 64
    %v521 = vpop.permute.xlu0 %520
    %522 = vrot.lane.b32.xlu0 %v512, 64
    %v523 = vpop.permute.xlu0 %522
    %524 = vrot.lane.b32.xlu0 %v513, 64
    %v525 = vpop.permute.xlu0 %524
    %530 = vst.msk [vmem:[#allocation3 + $0x40] sm:$0xff] %vm498, %v519
    %531 = vst.msk [vmem:[#allocation3 + $0x48] sm:$0xff] %vm498, %v521
    %532 = vst.msk [vmem:[#allocation3 + $0x50] sm:$0xff] %vm498, %v523
    %533 = vst.msk [vmem:[#allocation3 + $0x58] sm:$0xff] %vm498, %v525
    %s534 = scalar_lea.vmem [#allocation20], 128
    %v535 = vld [vmem:[%s534] sm:$0xff]
    %v536 = vld [vmem:[%s534 + $0x8] sm:$0xff]
    %v537 = vld [vmem:[%s534 + $0x10] sm:$0xff]
    %v538 = vld [vmem:[%s534 + $0x18] sm:$0xff]
    %v539 = vld [vmem:[%s534 + $0x20] sm:$0xff]
    %v540 = vld [vmem:[%s534 + $0x28] sm:$0xff]
    %v541 = vld [vmem:[%s534 + $0x30] sm:$0xff]
    %v542 = vld [vmem:[%s534 + $0x38] sm:$0xff]
    %v543 = vmul.f32 %v190, %v535
    %v544 = vmul.f32 %v191, %v536
    %v545 = vmul.f32 %v192, %v537
    %v546 = vmul.f32 %v193, %v538
    %v547 = vmul.f32 %v194, %v539
    %v548 = vmul.f32 %v195, %v540
    %v549 = vmul.f32 %v196, %v541
    %v550 = vmul.f32 %v197, %v542
    %v551 = vadd.f32 %v182, %v543
    %v552 = vadd.f32 %v183, %v544
    %v553 = vadd.f32 %v184, %v545
    %v554 = vadd.f32 %v185, %v546
    %v555 = vadd.f32 %v186, %v547
    %v556 = vadd.f32 %v187, %v548
    %v557 = vadd.f32 %v188, %v549
    %v558 = vadd.f32 %v189, %v550
    %559 = vst [vmem:[#allocation4 + $0x220] sm:$0xff] %v551
    %560 = vst [vmem:[#allocation4 + $0x228] sm:$0xff] %v552
    %561 = vst [vmem:[#allocation4 + $0x260] sm:$0xff] %v553
    %562 = vst [vmem:[#allocation4 + $0x268] sm:$0xff] %v554
    %563 = vst [vmem:[#allocation4 + $0x2a0] sm:$0xff] %v555
    %564 = vst [vmem:[#allocation4 + $0x2a8] sm:$0xff] %v556
    %565 = vst [vmem:[#allocation4 + $0x2e0] sm:$0xff] %v557
    %566 = vst [vmem:[#allocation4 + $0x2e8] sm:$0xff] %v558
    %s567 = scalar_lea.vmem [#allocation11], 48
    %v568 = vld [vmem:[%s567] sm:$0xff]
    %v569 = vld [vmem:[%s567 + $0x8] sm:$0xff]
    %v570 = vmul.f32 %v172, %v568
    %v571 = vmul.f32 %v173, %v569
    %v572 = vadd.f32 %v170, %v570
    %v573 = vadd.f32 %v171, %v571
    %576 = vrot.lane.b32.xlu0 %v572, 96
    %v577 = vpop.permute.xlu0 %576
    %578 = vrot.lane.b32.xlu0 %v573, 96
    %v579 = vpop.permute.xlu0 %578
    %vm582 = vcmask 1048320
    %583 = vst.msk [vmem:[#allocation2] sm:$0xff] %vm582, %v577
    %584 = vst.msk [vmem:[#allocation2 + $0x8] sm:$0xff] %vm582, %v579
    %s585 = scalar_lea.vmem [#allocation16], 96
    %v586 = vld [vmem:[%s585] sm:$0xff]
    %v587 = vld [vmem:[%s585 + $0x8] sm:$0xff]
    %v588 = vld [vmem:[%s585 + $0x10] sm:$0xff]
    %v589 = vld [vmem:[%s585 + $0x18] sm:$0xff]
    %v590 = vmul.f32 %v178, %v586
    %v591 = vmul.f32 %v179, %v587
    %v592 = vmul.f32 %v180, %v588
    %v593 = vmul.f32 %v181, %v589
    %v594 = vadd.f32 %v174, %v590
    %v595 = vadd.f32 %v175, %v591
    %v596 = vadd.f32 %v176, %v592
    %v597 = vadd.f32 %v177, %v593
    %602 = vrot.lane.b32.xlu0 %v594, 96
    %v603 = vpop.permute.xlu0 %602
    %604 = vrot.lane.b32.xlu0 %v595, 96
    %v605 = vpop.permute.xlu0 %604
    %606 = vrot.lane.b32.xlu0 %v596, 96
    %v607 = vpop.permute.xlu0 %606
    %608 = vrot.lane.b32.xlu0 %v597, 96
    %v609 = vpop.permute.xlu0 %608
    %614 = vst.msk [vmem:[#allocation3 + $0x60] sm:$0xff] %vm582, %v603
    %615 = vst.msk [vmem:[#allocation3 + $0x68] sm:$0xff] %vm582, %v605
    %616 = vst.msk [vmem:[#allocation3 + $0x70] sm:$0xff] %vm582, %v607
    %617 = vst.msk [vmem:[#allocation3 + $0x78] sm:$0xff] %vm582, %v609
    %s618 = scalar_lea.vmem [#allocation20], 192
    %v619 = vld [vmem:[%s618] sm:$0xff]
    %v620 = vld [vmem:[%s618 + $0x8] sm:$0xff]
    %v621 = vld [vmem:[%s618 + $0x10] sm:$0xff]
    %v622 = vld [vmem:[%s618 + $0x18] sm:$0xff]
    %v623 = vld [vmem:[%s618 + $0x20] sm:$0xff]
    %v624 = vld [vmem:[%s618 + $0x28] sm:$0xff]
    %v625 = vld [vmem:[%s618 + $0x30] sm:$0xff]
    %v626 = vld [vmem:[%s618 + $0x38] sm:$0xff]
    %v627 = vmul.f32 %v190, %v619
    %v628 = vmul.f32 %v191, %v620
    %v629 = vmul.f32 %v192, %v621
    %v630 = vmul.f32 %v193, %v622
    %v631 = vmul.f32 %v194, %v623
    %v632 = vmul.f32 %v195, %v624
    %v633 = vmul.f32 %v196, %v625
    %v634 = vmul.f32 %v197, %v626
    %v635 = vadd.f32 %v182, %v627
    %v636 = vadd.f32 %v183, %v628
    %v637 = vadd.f32 %v184, %v629
    %v638 = vadd.f32 %v185, %v630
    %v639 = vadd.f32 %v186, %v631
    %v640 = vadd.f32 %v187, %v632
    %v641 = vadd.f32 %v188, %v633
    %v642 = vadd.f32 %v189, %v634
    %643 = vst [vmem:[#allocation4 + $0x330] sm:$0xff] %v635
    %644 = vst [vmem:[#allocation4 + $0x338] sm:$0xff] %v636
    %645 = vst [vmem:[#allocation4 + $0x370] sm:$0xff] %v637
    %646 = vst [vmem:[#allocation4 + $0x378] sm:$0xff] %v638
    %647 = vst [vmem:[#allocation4 + $0x3b0] sm:$0xff] %v639
    %648 = vst [vmem:[#allocation4 + $0x3b8] sm:$0xff] %v640
    %649 = vst [vmem:[#allocation4 + $0x3f0] sm:$0xff] %v641
    %650 = vst [vmem:[#allocation4 + $0x3f8] sm:$0xff] %v642
    %v651 = vld [vmem:[#allocation5] sm:$0xff]
    %v652 = vld [vmem:[#allocation2] sm:$0xff]
    %v653 = vld [vmem:[#allocation2 + $0x8] sm:$0xff]
    %vm654 = vcmask 130048
    %v656 = vsel %vm654, %v651, 0
    %658 = vmatprep.subr.mxu0 0.0
    %659 = vmatpush1.msra.mxu0 %v652
    %660 = vmatprep.subr.mxu0 0.0
    %661 = vmatpush1.msra.mxu0 %v653
    %662 = vmatprep.subr.mxu0 0.0
    %663 = vmatpush1.msra.mxu0 0.0
    %664 = vmatprep.subr.mxu0 0.0
    %665 = vmatpush1.msra.mxu0 0.0
    %666 = vmatprep.subr.mxu0 0.0
    %667 = vmatpush1.msra.mxu0 0.0
    %668 = vmatprep.subr.mxu0 0.0
    %669 = vmatpush1.msra.mxu0 0.0
    %670 = vmatprep.subr.mxu0 0.0
    %671 = vmatpush1.msra.mxu0 0.0
    %672 = vmatprep.subr.mxu0 0.0
    %673 = vmatpush1.msra.mxu0 0.0
    %674 = vmatprep.subr.mxu0 0.0
    %675 = vmatpush1.msra.mxu0 0.0
    %676 = vmatprep.subr.mxu0 0.0
    %677 = vmatpush1.msra.mxu0 0.0
    %678 = vmatprep.subr.mxu0 0.0
    %679 = vmatpush1.msra.mxu0 0.0
    %680 = vmatprep.subr.mxu0 0.0
    %681 = vmatpush1.msra.mxu0 0.0
    %682 = vmatprep.subr.mxu0 0.0
    %683 = vmatpush1.msra.mxu0 0.0
    %684 = vmatprep.subr.mxu0 0.0
    %685 = vmatpush1.msra.mxu0 0.0
    %686 = vmatprep.subr.mxu0 0.0
    %687 = vmatpush1.msra.mxu0 0.0
    %688 = vmatprep.subr.mxu0 0.0
    %689 = vmatpush1.msra.mxu0 0.0
    %690 = vmatprep.subr.mxu0 0.0
    %691 = vmatpush1.msra.mxu0 0.0
    %692 = vmatprep.subr.mxu0 0.0
    %693 = vmatpush1.msra.mxu0 0.0
    %694 = vmatprep.subr.mxu0 0.0
    %695 = vmatpush1.msra.mxu0 0.0
    %696 = vmatprep.subr.mxu0 0.0
    %697 = vmatpush1.msra.mxu0 0.0
    %698 = vmatprep.subr.mxu0 0.0
    %699 = vmatpush1.msra.mxu0 0.0
    %700 = vmatprep.subr.mxu0 0.0
    %701 = vmatpush1.msra.mxu0 0.0
    %702 = vmatprep.subr.mxu0 0.0
    %703 = vmatpush1.msra.mxu0 0.0
    %704 = vmatprep.subr.mxu0 0.0
    %705 = vmatpush1.msra.mxu0 0.0
    %706 = vmatprep.subr.mxu0 0.0
    %707 = vmatpush1.msra.mxu0 0.0
    %708 = vmatprep.subr.mxu0 0.0
    %709 = vmatpush1.msra.mxu0 0.0
    %710 = vmatprep.subr.mxu0 0.0
    %711 = vmatpush1.msra.mxu0 0.0
    %712 = vmatprep.subr.mxu0 0.0
    %713 = vmatpush1.msra.mxu0 0.0
    %714 = vmatprep.subr.mxu0 0.0
    %715 = vmatpush1.msra.mxu0 0.0
    %716 = vmatprep.subr.mxu0 0.0
    %717 = vmatpush1.msra.mxu0 0.0
    %718 = vmatprep.subr.mxu0 0.0
    %719 = vmatpush1.msra.mxu0 0.0
    %720 = vmatprep.subr.mxu0 0.0
    %721 = vmatpush1.msra.mxu0 0.0
    %722 = vmatprep.mubr.f32.mxu0 0.0
    %723 = vmatmul.mubr.f32.gmra.mrb[0].mxu0 %v656
    %v724 = vpop.f32.mrb[0].mxu0
    %v725 = vadd.f32 0.0, %v724
    %v726 = vpop.f32.mrb[0].mxu0
    %727 = vdwg.mxu0
    %v728 = vmax.f32 %v725, 0.0
    %v729 = vand.u32 2147483647, %v725
    %v730 = vsub.f32 0.0, %v729
    %v731 = vmul.f32 %v730, 1.442695
    %v732 = vpow.pop %v731
    %v733 = vadd.f32 %v732, 1.0
    %v734 = vlog2.pop %v733
    %v735 = vmul.f32 %v734, 0.6931472
    %v736 = vadd.f32 %v728, %v735
    %v737 = vld [vmem:[#allocation3] sm:$0xff]
    %v738 = vld [vmem:[#allocation3 + $0x8] sm:$0xff]
    %v739 = vld [vmem:[#allocation3 + $0x10] sm:$0xff]
    %v740 = vld [vmem:[#allocation3 + $0x18] sm:$0xff]
    %v741 = vld [vmem:[#allocation3 + $0x20] sm:$0xff]
    %v742 = vld [vmem:[#allocation3 + $0x28] sm:$0xff]
    %v743 = vld [vmem:[#allocation3 + $0x30] sm:$0xff]
    %v744 = vld [vmem:[#allocation3 + $0x38] sm:$0xff]
    %v745 = vld [vmem:[#allocation3 + $0x40] sm:$0xff]
    %v746 = vld [vmem:[#allocation3 + $0x48] sm:$0xff]
    %v747 = vld [vmem:[#allocation3 + $0x50] sm:$0xff]
    %v748 = vld [vmem:[#allocation3 + $0x58] sm:$0xff]
    %v749 = vld [vmem:[#allocation3 + $0x60] sm:$0xff]
    %v750 = vld [vmem:[#allocation3 + $0x68] sm:$0xff]
    %v751 = vld [vmem:[#allocation3 + $0x70] sm:$0xff]
    %v752 = vld [vmem:[#allocation3 + $0x78] sm:$0xff]
    %753 = vmatprep.subr.mxu0 0.0
    %754 = vmatpush1.msra.mxu0 %v737
    %755 = vmatprep.subr.mxu0 0.0
    %756 = vmatpush1.msra.mxu0 %v738
    %757 = vmatprep.subr.mxu0 0.0
    %758 = vmatpush1.msra.mxu0 %v739
    %759 = vmatprep.subr.mxu0 0.0
    %760 = vmatpush1.msra.mxu0 %v740
    %761 = vmatprep.subr.mxu0 0.0
    %762 = vmatpush1.msra.mxu0 %v741
    %763 = vmatprep.subr.mxu0 0.0
    %764 = vmatpush1.msra.mxu0 %v742
    %765 = vmatprep.subr.mxu0 0.0
    %766 = vmatpush1.msra.mxu0 %v743
    %767 = vmatprep.subr.mxu0 0.0
    %768 = vmatpush1.msra.mxu0 %v744
    %769 = vmatprep.subr.mxu0 0.0
    %770 = vmatpush1.msra.mxu0 %v745
    %771 = vmatprep.subr.mxu0 0.0
    %772 = vmatpush1.msra.mxu0 %v746
    %773 = vmatprep.subr.mxu0 0.0
    %774 = vmatpush1.msra.mxu0 %v747
    %775 = vmatprep.subr.mxu0 0.0
    %776 = vmatpush1.msra.mxu0 %v748
    %777 = vmatprep.subr.mxu0 0.0
    %778 = vmatpush1.msra.mxu0 %v749
    %779 = vmatprep.subr.mxu0 0.0
    %780 = vmatpush1.msra.mxu0 %v750
    %781 = vmatprep.subr.mxu0 0.0
    %782 = vmatpush1.msra.mxu0 %v751
    %783 = vmatprep.subr.mxu0 0.0
    %784 = vmatpush1.msra.mxu0 %v752
    %785 = vmatprep.subr.mxu0 0.0
    %786 = vmatpush1.msra.mxu0 0.0
    %787 = vmatprep.subr.mxu0 0.0
    %788 = vmatpush1.msra.mxu0 0.0
    %789 = vmatprep.subr.mxu0 0.0
    %790 = vmatpush1.msra.mxu0 0.0
    %791 = vmatprep.subr.mxu0 0.0
    %792 = vmatpush1.msra.mxu0 0.0
    %793 = vmatprep.subr.mxu0 0.0
    %794 = vmatpush1.msra.mxu0 0.0
    %795 = vmatprep.subr.mxu0 0.0
    %796 = vmatpush1.msra.mxu0 0.0
    %797 = vmatprep.subr.mxu0 0.0
    %798 = vmatpush1.msra.mxu0 0.0
    %799 = vmatprep.subr.mxu0 0.0
    %800 = vmatpush1.msra.mxu0 0.0
    %801 = vmatprep.subr.mxu0 0.0
    %802 = vmatpush1.msra.mxu0 0.0
    %803 = vmatprep.subr.mxu0 0.0
    %804 = vmatpush1.msra.mxu0 0.0
    %805 = vmatprep.subr.mxu0 0.0
    %806 = vmatpush1.msra.mxu0 0.0
    %807 = vmatprep.subr.mxu0 0.0
    %808 = vmatpush1.msra.mxu0 0.0
    %809 = vmatprep.subr.mxu0 0.0
    %810 = vmatpush1.msra.mxu0 0.0
    %811 = vmatprep.subr.mxu0 0.0
    %812 = vmatpush1.msra.mxu0 0.0
    %813 = vmatprep.subr.mxu0 0.0
    %814 = vmatpush1.msra.mxu0 0.0
    %815 = vmatprep.subr.mxu0 0.0
    %816 = vmatpush1.msra.mxu0 0.0
    %817 = vmatprep.mubr.f32.mxu0 0.0
    %818 = vmatmul.mubr.f32.gmra.mrb[0].mxu0 %v736
    %v819 = vpop.f32.mrb[0].mxu0
    %v820 = vadd.f32 0.0, %v819
    %v821 = vpop.f32.mrb[0].mxu0
    %822 = vdwg.mxu0
    %v823 = vmax.f32 %v820, 0.0
    %v824 = vand.u32 2147483647, %v820
    %v825 = vsub.f32 0.0, %v824
    %v826 = vmul.f32 %v825, 1.442695
    %v827 = vpow.pop %v826
    %v828 = vadd.f32 %v827, 1.0
    %v829 = vlog2.pop %v828
    %v830 = vmul.f32 %v829, 0.6931472
    %v831 = vadd.f32 %v823, %v830
    %v832 = vld [vmem:[#allocation4] sm:$0xff]
    %v833 = vld [vmem:[#allocation4 + $0x8] sm:$0xff]
    %v834 = vld [vmem:[#allocation4 + $0x10] sm:$0xff]
    %v835 = vld [vmem:[#allocation4 + $0x18] sm:$0xff]
    %v836 = vld [vmem:[#allocation4 + $0x20] sm:$0xff]
    %v837 = vld [vmem:[#allocation4 + $0x28] sm:$0xff]
    %v838 = vld [vmem:[#allocation4 + $0x30] sm:$0xff]
    %v839 = vld [vmem:[#allocation4 + $0x38] sm:$0xff]
    %v840 = vld [vmem:[#allocation4 + $0x40] sm:$0xff]
    %v841 = vld [vmem:[#allocation4 + $0x48] sm:$0xff]
    %v842 = vld [vmem:[#allocation4 + $0x50] sm:$0xff]
    %v843 = vld [vmem:[#allocation4 + $0x58] sm:$0xff]
    %v844 = vld [vmem:[#allocation4 + $0x60] sm:$0xff]
    %v845 = vld [vmem:[#allocation4 + $0x68] sm:$0xff]
    %v846 = vld [vmem:[#allocation4 + $0x70] sm:$0xff]
    %v847 = vld [vmem:[#allocation4 + $0x78] sm:$0xff]
    %v848 = vld [vmem:[#allocation4 + $0x80] sm:$0xff]
    %v849 = vld [vmem:[#allocation4 + $0x88] sm:$0xff]
    %v850 = vld [vmem:[#allocation4 + $0x90] sm:$0xff]
    %v851 = vld [vmem:[#allocation4 + $0x98] sm:$0xff]
    %v852 = vld [vmem:[#allocation4 + $0xa0] sm:$0xff]
    %v853 = vld [vmem:[#allocation4 + $0xa8] sm:$0xff]
    %v854 = vld [vmem:[#allocation4 + $0xb0] sm:$0xff]
    %v855 = vld [vmem:[#allocation4 + $0xb8] sm:$0xff]
    %v856 = vld [vmem:[#allocation4 + $0xc0] sm:$0xff]
    %v857 = vld [vmem:[#allocation4 + $0xc8] sm:$0xff]
    %v858 = vld [vmem:[#allocation4 + $0xd0] sm:$0xff]
    %v859 = vld [vmem:[#allocation4 + $0xd8] sm:$0xff]
    %v860 = vld [vmem:[#allocation4 + $0xe0] sm:$0xff]
    %v861 = vld [vmem:[#allocation4 + $0xe8] sm:$0xff]
    %v862 = vld [vmem:[#allocation4 + $0xf0] sm:$0xff]
    %v863 = vld [vmem:[#allocation4 + $0xf8] sm:$0xff]
    %v864 = vld [vmem:[#allocation4 + $0x100] sm:$0xff]
    %v865 = vld [vmem:[#allocation4 + $0x108] sm:$0xff]
    %v866 = vld [vmem:[#allocation4 + $0x110] sm:$0xff]
    %v867 = vld [vmem:[#allocation4 + $0x118] sm:$0xff]
    %v868 = vld [vmem:[#allocation4 + $0x120] sm:$0xff]
    %v869 = vld [vmem:[#allocation4 + $0x128] sm:$0xff]
    %v870 = vld [vmem:[#allocation4 + $0x130] sm:$0xff]
    %v871 = vld [vmem:[#allocation4 + $0x138] sm:$0xff]
    %v872 = vld [vmem:[#allocation4 + $0x140] sm:$0xff]
    %v873 = vld [vmem:[#allocation4 + $0x148] sm:$0xff]
    %v874 = vld [vmem:[#allocation4 + $0x150] sm:$0xff]
    %v875 = vld [vmem:[#allocation4 + $0x158] sm:$0xff]
    %v876 = vld [vmem:[#allocation4 + $0x160] sm:$0xff]
    %v877 = vld [vmem:[#allocation4 + $0x168] sm:$0xff]
    %v878 = vld [vmem:[#allocation4 + $0x170] sm:$0xff]
    %v879 = vld [vmem:[#allocation4 + $0x178] sm:$0xff]
    %v880 = vld [vmem:[#allocation4 + $0x180] sm:$0xff]
    %v881 = vld [vmem:[#allocation4 + $0x188] sm:$0xff]
    %v882 = vld [vmem:[#allocation4 + $0x190] sm:$0xff]
    %v883 = vld [vmem:[#allocation4 + $0x198] sm:$0xff]
    %v884 = vld [vmem:[#allocation4 + $0x1a0] sm:$0xff]
    %v885 = vld [vmem:[#allocation4 + $0x1a8] sm:$0xff]
    %v886 = vld [vmem:[#allocation4 + $0x1b0] sm:$0xff]
    %v887 = vld [vmem:[#allocation4 + $0x1b8] sm:$0xff]
    %v888 = vld [vmem:[#allocation4 + $0x1c0] sm:$0xff]
    %v889 = vld [vmem:[#allocation4 + $0x1c8] sm:$0xff]
    %v890 = vld [vmem:[#allocation4 + $0x1d0] sm:$0xff]
    %v891 = vld [vmem:[#allocation4 + $0x1d8] sm:$0xff]
    %v892 = vld [vmem:[#allocation4 + $0x1e0] sm:$0xff]
    %v893 = vld [vmem:[#allocation4 + $0x1e8] sm:$0xff]
    %v894 = vld [vmem:[#allocation4 + $0x1f0] sm:$0xff]
    %v895 = vld [vmem:[#allocation4 + $0x1f8] sm:$0xff]
    %v896 = vld [vmem:[#allocation4 + $0x200] sm:$0xff]
    %v897 = vld [vmem:[#allocation4 + $0x208] sm:$0xff]
    %v898 = vld [vmem:[#allocation4 + $0x210] sm:$0xff]
    %v899 = vld [vmem:[#allocation4 + $0x218] sm:$0xff]
    %v900 = vld [vmem:[#allocation4 + $0x220] sm:$0xff]
    %v901 = vld [vmem:[#allocation4 + $0x228] sm:$0xff]
    %v902 = vld [vmem:[#allocation4 + $0x230] sm:$0xff]
    %v903 = vld [vmem:[#allocation4 + $0x238] sm:$0xff]
    %v904 = vld [vmem:[#allocation4 + $0x240] sm:$0xff]
    %v905 = vld [vmem:[#allocation4 + $0x248] sm:$0xff]
    %v906 = vld [vmem:[#allocation4 + $0x250] sm:$0xff]
    %v907 = vld [vmem:[#allocation4 + $0x258] sm:$0xff]
    %v908 = vld [vmem:[#allocation4 + $0x260] sm:$0xff]
    %v909 = vld [vmem:[#allocation4 + $0x268] sm:$0xff]
    %v910 = vld [vmem:[#allocation4 + $0x270] sm:$0xff]
    %v911 = vld [vmem:[#allocation4 + $0x278] sm:$0xff]
    %v912 = vld [vmem:[#allocation4 + $0x280] sm:$0xff]
    %v913 = vld [vmem:[#allocation4 + $0x288] sm:$0xff]
    %v914 = vld [vmem:[#allocation4 + $0x290] sm:$0xff]
    %v915 = vld [vmem:[#allocation4 + $0x298] sm:$0xff]
    %v916 = vld [vmem:[#allocation4 + $0x2a0] sm:$0xff]
    %v917 = vld [vmem:[#allocation4 + $0x2a8] sm:$0xff]
    %v918 = vld [vmem:[#allocation4 + $0x2b0] sm:$0xff]
    %v919 = vld [vmem:[#allocation4 + $0x2b8] sm:$0xff]
    %v920 = vld [vmem:[#allocation4 + $0x2c0] sm:$0xff]
    %v921 = vld [vmem:[#allocation4 + $0x2c8] sm:$0xff]
    %v922 = vld [vmem:[#allocation4 + $0x2d0] sm:$0xff]
    %v923 = vld [vmem:[#allocation4 + $0x2d8] sm:$0xff]
    %v924 = vld [vmem:[#allocation4 + $0x2e0] sm:$0xff]
    %v925 = vld [vmem:[#allocation4 + $0x2e8] sm:$0xff]
    %v926 = vld [vmem:[#allocation4 + $0x2f0] sm:$0xff]
    %v927 = vld [vmem:[#allocation4 + $0x2f8] sm:$0xff]
    %v928 = vld [vmem:[#allocation4 + $0x300] sm:$0xff]
    %v929 = vld [vmem:[#allocation4 + $0x308] sm:$0xff]
    %v930 = vld [vmem:[#allocation4 + $0x310] sm:$0xff]
    %v931 = vld [vmem:[#allocation4 + $0x318] sm:$0xff]
    %v932 = vld [vmem:[#allocation4 + $0x320] sm:$0xff]
    %v933 = vld [vmem:[#allocation4 + $0x328] sm:$0xff]
    %v934 = vld [vmem:[#allocation4 + $0x330] sm:$0xff]
    %v935 = vld [vmem:[#allocation4 + $0x338] sm:$0xff]
    %v936 = vld [vmem:[#allocation4 + $0x340] sm:$0xff]
    %v937 = vld [vmem:[#allocation4 + $0x348] sm:$0xff]
    %v938 = vld [vmem:[#allocation4 + $0x350] sm:$0xff]
    %v939 = vld [vmem:[#allocation4 + $0x358] sm:$0xff]
    %v940 = vld [vmem:[#allocation4 + $0x360] sm:$0xff]
    %v941 = vld [vmem:[#allocation4 + $0x368] sm:$0xff]
    %v942 = vld [vmem:[#allocation4 + $0x370] sm:$0xff]
    %v943 = vld [vmem:[#allocation4 + $0x378] sm:$0xff]
    %v944 = vld [vmem:[#allocation4 + $0x380] sm:$0xff]
    %v945 = vld [vmem:[#allocation4 + $0x388] sm:$0xff]
    %v946 = vld [vmem:[#allocation4 + $0x390] sm:$0xff]
    %v947 = vld [vmem:[#allocation4 + $0x398] sm:$0xff]
    %v948 = vld [vmem:[#allocation4 + $0x3a0] sm:$0xff]
    %v949 = vld [vmem:[#allocation4 + $0x3a8] sm:$0xff]
    %v950 = vld [vmem:[#allocation4 + $0x3b0] sm:$0xff]
    %v951 = vld [vmem:[#allocation4 + $0x3b8] sm:$0xff]
    %v952 = vld [vmem:[#allocation4 + $0x3c0] sm:$0xff]
    %v953 = vld [vmem:[#allocation4 + $0x3c8] sm:$0xff]
    %v954 = vld [vmem:[#allocation4 + $0x3d0] sm:$0xff]
    %v955 = vld [vmem:[#allocation4 + $0x3d8] sm:$0xff]
    %v956 = vld [vmem:[#allocation4 + $0x3e0] sm:$0xff]
    %v957 = vld [vmem:[#allocation4 + $0x3e8] sm:$0xff]
    %v958 = vld [vmem:[#allocation4 + $0x3f0] sm:$0xff]
    %v959 = vld [vmem:[#allocation4 + $0x3f8] sm:$0xff]
    %960 = vmatprep.subr.mxu0 %v833
    %961 = vmatpush1.msra.mxu0 %v832
    %962 = vmatprep.subr.mxu0 %v841
    %963 = vmatpush1.msra.mxu0 %v840
    %964 = vmatprep.subr.mxu0 %v849
    %965 = vmatpush1.msra.mxu0 %v848
    %966 = vmatprep.subr.mxu0 %v857
    %967 = vmatpush1.msra.mxu0 %v856
    %968 = vmatprep.subr.mxu0 %v865
    %969 = vmatpush1.msra.mxu0 %v864
    %970 = vmatprep.subr.mxu0 %v873
    %971 = vmatpush1.msra.mxu0 %v872
    %972 = vmatprep.subr.mxu0 %v881
    %973 = vmatpush1.msra.mxu0 %v880
    %974 = vmatprep.subr.mxu0 %v889
    %975 = vmatpush1.msra.mxu0 %v888
    %976 = vmatprep.subr.mxu0 %v897
    %977 = vmatpush1.msra.mxu0 %v896
    %978 = vmatprep.subr.mxu0 %v905
    %979 = vmatpush1.msra.mxu0 %v904
    %980 = vmatprep.subr.mxu0 %v913
    %981 = vmatpush1.msra.mxu0 %v912
    %982 = vmatprep.subr.mxu0 %v921
    %983 = vmatpush1.msra.mxu0 %v920
    %984 = vmatprep.subr.mxu0 %v929
    %985 = vmatpush1.msra.mxu0 %v928
    %986 = vmatprep.subr.mxu0 %v937
    %987 = vmatpush1.msra.mxu0 %v936
    %988 = vmatprep.subr.mxu0 %v945
    %989 = vmatpush1.msra.mxu0 %v944
    %990 = vmatprep.subr.mxu0 %v953
    %991 = vmatpush1.msra.mxu0 %v952
    %992 = vmatprep.subr.mxu0 0.0
    %993 = vmatpush1.msra.mxu0 0.0
    %994 = vmatprep.subr.mxu0 0.0
    %995 = vmatpush1.msra.mxu0 0.0
    %996 = vmatprep.subr.mxu0 0.0
    %997 = vmatpush1.msra.mxu0 0.0
    %998 = vmatprep.subr.mxu0 0.0
    %999 = vmatpush1.msra.mxu0 0.0
    %1000 = vmatprep.subr.mxu0 0.0
    %1001 = vmatpush1.msra.mxu0 0.0
    %1002 = vmatprep.subr.mxu0 0.0
    %1003 = vmatpush1.msra.mxu0 0.0
    %1004 = vmatprep.subr.mxu0 0.0
    %1005 = vmatpush1.msra.mxu0 0.0
    %1006 = vmatprep.subr.mxu0 0.0
    %1007 = vmatpush1.msra.mxu0 0.0
    %1008 = vmatprep.subr.mxu0 0.0
    %1009 = vmatpush1.msra.mxu0 0.0
    %1010 = vmatprep.subr.mxu0 0.0
    %1011 = vmatpush1.msra.mxu0 0.0
    %1012 = vmatprep.subr.mxu0 0.0
    %1013 = vmatpush1.msra.mxu0 0.0
    %1014 = vmatprep.subr.mxu0 0.0
    %1015 = vmatpush1.msra.mxu0 0.0
    %1016 = vmatprep.subr.mxu0 0.0
    %1017 = vmatpush1.msra.mxu0 0.0
    %1018 = vmatprep.subr.mxu0 0.0
    %1019 = vmatpush1.msra.mxu0 0.0
    %1020 = vmatprep.subr.mxu0 0.0
    %1021 = vmatpush1.msra.mxu0 0.0
    %1022 = vmatprep.subr.mxu0 0.0
    %1023 = vmatpush1.msra.mxu0 0.0
    %1024 = vmatprep.mubr.f32.mxu0 0.0
    %1025 = vmatmul.mubr.f32.gmra.mrb[0].mxu0 %v831
    %v1026 = vpop.f32.mrb[0].mxu0
    %v1027 = vadd.f32 0.0, %v1026
    %v1028 = vpop.f32.mrb[0].mxu0
    %v1029 = vadd.f32 0.0, %v1028
    %1030 = vdwg.mxu0
    %1031 = vmatprep.subr.mxu0 %v835
    %1032 = vmatpush1.msra.mxu0 %v834
    %1033 = vmatprep.subr.mxu0 %v843
    %1034 = vmatpush1.msra.mxu0 %v842
    %1035 = vmatprep.subr.mxu0 %v851
    %1036 = vmatpush1.msra.mxu0 %v850
    %1037 = vmatprep.subr.mxu0 %v859
    %1038 = vmatpush1.msra.mxu0 %v858
    %1039 = vmatprep.subr.mxu0 %v867
    %1040 = vmatpush1.msra.mxu0 %v866
    %1041 = vmatprep.subr.mxu0 %v875
    %1042 = vmatpush1.msra.mxu0 %v874
    %1043 = vmatprep.subr.mxu0 %v883
    %1044 = vmatpush1.msra.mxu0 %v882
    %1045 = vmatprep.subr.mxu0 %v891
    %1046 = vmatpush1.msra.mxu0 %v890
    %1047 = vmatprep.subr.mxu0 %v899
    %1048 = vmatpush1.msra.mxu0 %v898
    %1049 = vmatprep.subr.mxu0 %v907
    %1050 = vmatpush1.msra.mxu0 %v906
    %1051 = vmatprep.subr.mxu0 %v915
    %1052 = vmatpush1.msra.mxu0 %v914
    %1053 = vmatprep.subr.mxu0 %v923
    %1054 = vmatpush1.msra.mxu0 %v922
    %1055 = vmatprep.subr.mxu0 %v931
    %1056 = vmatpush1.msra.mxu0 %v930
    %1057 = vmatprep.subr.mxu0 %v939
    %1058 = vmatpush1.msra.mxu0 %v938
    %1059 = vmatprep.subr.mxu0 %v947
    %1060 = vmatpush1.msra.mxu0 %v946
    %1061 = vmatprep.subr.mxu0 %v955
    %1062 = vmatpush1.msra.mxu0 %v954
    %1063 = vmatprep.subr.mxu0 0.0
    %1064 = vmatpush1.msra.mxu0 0.0
    %1065 = vmatprep.subr.mxu0 0.0
    %1066 = vmatpush1.msra.mxu0 0.0
    %1067 = vmatprep.subr.mxu0 0.0
    %1068 = vmatpush1.msra.mxu0 0.0
    %1069 = vmatprep.subr.mxu0 0.0
    %1070 = vmatpush1.msra.mxu0 0.0
    %1071 = vmatprep.subr.mxu0 0.0
    %1072 = vmatpush1.msra.mxu0 0.0
    %1073 = vmatprep.subr.mxu0 0.0
    %1074 = vmatpush1.msra.mxu0 0.0
    %1075 = vmatprep.subr.mxu0 0.0
    %1076 = vmatpush1.msra.mxu0 0.0
    %1077 = vmatprep.subr.mxu0 0.0
    %1078 = vmatpush1.msra.mxu0 0.0
    %1079 = vmatprep.subr.mxu0 0.0
    %1080 = vmatpush1.msra.mxu0 0.0
    %1081 = vmatprep.subr.mxu0 0.0
    %1082 = vmatpush1.msra.mxu0 0.0
    %1083 = vmatprep.subr.mxu0 0.0
    %1084 = vmatpush1.msra.mxu0 0.0
    %1085 = vmatprep.subr.mxu0 0.0
    %1086 = vmatpush1.msra.mxu0 0.0
    %1087 = vmatprep.subr.mxu0 0.0
    %1088 = vmatpush1.msra.mxu0 0.0
    %1089 = vmatprep.subr.mxu0 0.0
    %1090 = vmatpush1.msra.mxu0 0.0
    %1091 = vmatprep.subr.mxu0 0.0
    %1092 = vmatpush1.msra.mxu0 0.0
    %1093 = vmatprep.subr.mxu0 0.0
    %1094 = vmatpush1.msra.mxu0 0.0
    %1095 = vmatprep.mubr.f32.mxu0 0.0
    %1096 = vmatmul.mubr.f32.gmra.mrb[0].mxu0 %v831
    %v1097 = vpop.f32.mrb[0].mxu0
    %v1098 = vadd.f32 0.0, %v1097
    %v1099 = vpop.f32.mrb[0].mxu0
    %v1100 = vadd.f32 0.0, %v1099
    %1101 = vdwg.mxu0
    %1102 = vmatprep.subr.mxu0 %v837
    %1103 = vmatpush1.msra.mxu0 %v836
    %1104 = vmatprep.subr.mxu0 %v845
    %1105 = vmatpush1.msra.mxu0 %v844
    %1106 = vmatprep.subr.mxu0 %v853
    %1107 = vmatpush1.msra.mxu0 %v852
    %1108 = vmatprep.subr.mxu0 %v861
    %1109 = vmatpush1.msra.mxu0 %v860
    %1110 = vmatprep.subr.mxu0 %v869
    %1111 = vmatpush1.msra.mxu0 %v868
    %1112 = vmatprep.subr.mxu0 %v877
    %1113 = vmatpush1.msra.mxu0 %v876
    %1114 = vmatprep.subr.mxu0 %v885
    %1115 = vmatpush1.msra.mxu0 %v884
    %1116 = vmatprep.subr.mxu0 %v893
    %1117 = vmatpush1.msra.mxu0 %v892
    %1118 = vmatprep.subr.mxu0 %v901
    %1119 = vmatpush1.msra.mxu0 %v900
    %1120 = vmatprep.subr.mxu0 %v909
    %1121 = vmatpush1.msra.mxu0 %v908
    %1122 = vmatprep.subr.mxu0 %v917
    %1123 = vmatpush1.msra.mxu0 %v916
    %1124 = vmatprep.subr.mxu0 %v925
    %1125 = vmatpush1.msra.mxu0 %v924
    %1126 = vmatprep.subr.mxu0 %v933
    %1127 = vmatpush1.msra.mxu0 %v932
    %1128 = vmatprep.subr.mxu0 %v941
    %1129 = vmatpush1.msra.mxu0 %v940
    %1130 = vmatprep.subr.mxu0 %v949
    %1131 = vmatpush1.msra.mxu0 %v948
    %1132 = vmatprep.subr.mxu0 %v957
    %1133 = vmatpush1.msra.mxu0 %v956
    %1134 = vmatprep.subr.mxu0 0.0
    %1135 = vmatpush1.msra.mxu0 0.0
    %1136 = vmatprep.subr.mxu0 0.0
    %1137 = vmatpush1.msra.mxu0 0.0
    %1138 = vmatprep.subr.mxu0 0.0
    %1139 = vmatpush1.msra.mxu0 0.0
    %1140 = vmatprep.subr.mxu0 0.0
    %1141 = vmatpush1.msra.mxu0 0.0
    %1142 = vmatprep.subr.mxu0 0.0
    %1143 = vmatpush1.msra.mxu0 0.0
    %1144 = vmatprep.subr.mxu0 0.0
    %1145 = vmatpush1.msra.mxu0 0.0
    %1146 = vmatprep.subr.mxu0 0.0
    %1147 = vmatpush1.msra.mxu0 0.0
    %1148 = vmatprep.subr.mxu0 0.0
    %1149 = vmatpush1.msra.mxu0 0.0
    %1150 = vmatprep.subr.mxu0 0.0
    %1151 = vmatpush1.msra.mxu0 0.0
    %1152 = vmatprep.subr.mxu0 0.0
    %1153 = vmatpush1.msra.mxu0 0.0
    %1154 = vmatprep.subr.mxu0 0.0
    %1155 = vmatpush1.msra.mxu0 0.0
    %1156 = vmatprep.subr.mxu0 0.0
    %1157 = vmatpush1.msra.mxu0 0.0
    %1158 = vmatprep.subr.mxu0 0.0
    %1159 = vmatpush1.msra.mxu0 0.0
    %1160 = vmatprep.subr.mxu0 0.0
    %1161 = vmatpush1.msra.mxu0 0.0
    %1162 = vmatprep.subr.mxu0 0.0
    %1163 = vmatpush1.msra.mxu0 0.0
    %1164 = vmatprep.subr.mxu0 0.0
    %1165 = vmatpush1.msra.mxu0 0.0
    %1166 = vmatprep.mubr.f32.mxu0 0.0
    %1167 = vmatmul.mubr.f32.gmra.mrb[0].mxu0 %v831
    %v1168 = vpop.f32.mrb[0].mxu0
    %v1169 = vadd.f32 0.0, %v1168
    %v1170 = vpop.f32.mrb[0].mxu0
    %v1171 = vadd.f32 0.0, %v1170
    %1172 = vdwg.mxu0
    %1173 = vmatprep.subr.mxu0 %v839
    %1174 = vmatpush1.msra.mxu0 %v838
    %1175 = vmatprep.subr.mxu0 %v847
    %1176 = vmatpush1.msra.mxu0 %v846
    %1177 = vmatprep.subr.mxu0 %v855
    %1178 = vmatpush1.msra.mxu0 %v854
    %1179 = vmatprep.subr.mxu0 %v863
    %1180 = vmatpush1.msra.mxu0 %v862
    %1181 = vmatprep.subr.mxu0 %v871
    %1182 = vmatpush1.msra.mxu0 %v870
    %1183 = vmatprep.subr.mxu0 %v879
    %1184 = vmatpush1.msra.mxu0 %v878
    %1185 = vmatprep.subr.mxu0 %v887
    %1186 = vmatpush1.msra.mxu0 %v886
    %1187 = vmatprep.subr.mxu0 %v895
    %1188 = vmatpush1.msra.mxu0 %v894
    %1189 = vmatprep.subr.mxu0 %v903
    %1190 = vmatpush1.msra.mxu0 %v902
    %1191 = vmatprep.subr.mxu0 %v911
    %1192 = vmatpush1.msra.mxu0 %v910
    %1193 = vmatprep.subr.mxu0 %v919
    %1194 = vmatpush1.msra.mxu0 %v918
    %1195 = vmatprep.subr.mxu0 %v927
    %1196 = vmatpush1.msra.mxu0 %v926
    %1197 = vmatprep.subr.mxu0 %v935
    %1198 = vmatpush1.msra.mxu0 %v934
    %1199 = vmatprep.subr.mxu0 %v943
    %1200 = vmatpush1.msra.mxu0 %v942
    %1201 = vmatprep.subr.mxu0 %v951
    %1202 = vmatpush1.msra.mxu0 %v950
    %1203 = vmatprep.subr.mxu0 %v959
    %1204 = vmatpush1.msra.mxu0 %v958
    %1205 = vmatprep.subr.mxu0 0.0
    %1206 = vmatpush1.msra.mxu0 0.0
    %1207 = vmatprep.subr.mxu0 0.0
    %1208 = vmatpush1.msra.mxu0 0.0
    %1209 = vmatprep.subr.mxu0 0.0
    %1210 = vmatpush1.msra.mxu0 0.0
    %1211 = vmatprep.subr.mxu0 0.0
    %1212 = vmatpush1.msra.mxu0 0.0
    %1213 = vmatprep.subr.mxu0 0.0
    %1214 = vmatpush1.msra.mxu0 0.0
    %1215 = vmatprep.subr.mxu0 0.0
    %1216 = vmatpush1.msra.mxu0 0.0
    %1217 = vmatprep.subr.mxu0 0.0
    %1218 = vmatpush1.msra.mxu0 0.0
    %1219 = vmatprep.subr.mxu0 0.0
    %1220 = vmatpush1.msra.mxu0 0.0
    %1221 = vmatprep.subr.mxu0 0.0
    %1222 = vmatpush1.msra.mxu0 0.0
    %1223 = vmatprep.subr.mxu0 0.0
    %1224 = vmatpush1.msra.mxu0 0.0
    %1225 = vmatprep.subr.mxu0 0.0
    %1226 = vmatpush1.msra.mxu0 0.0
    %1227 = vmatprep.subr.mxu0 0.0
    %1228 = vmatpush1.msra.mxu0 0.0
    %1229 = vmatprep.subr.mxu0 0.0
    %1230 = vmatpush1.msra.mxu0 0.0
    %1231 = vmatprep.subr.mxu0 0.0
    %1232 = vmatpush1.msra.mxu0 0.0
    %1233 = vmatprep.subr.mxu0 0.0
    %1234 = vmatpush1.msra.mxu0 0.0
    %1235 = vmatprep.subr.mxu0 0.0
    %1236 = vmatpush1.msra.mxu0 0.0
    %1237 = vmatprep.mubr.f32.mxu0 0.0
    %1238 = vmatmul.mubr.f32.gmra.mrb[0].mxu0 %v831
    %v1239 = vpop.f32.mrb[0].mxu0
    %v1240 = vadd.f32 0.0, %v1239
    %v1241 = vpop.f32.mrb[0].mxu0
    %v1242 = vadd.f32 0.0, %v1241
    %1243 = vdwg.mxu0
    %1244 = vst [vmem:[#allocation22] sm:$0xff] %v1027
    %1245 = vst [vmem:[#allocation22 + $0x8] sm:$0xff] %v1029
    %1246 = vst [vmem:[#allocation22 + $0x10] sm:$0xff] %v1098
    %1247 = vst [vmem:[#allocation22 + $0x18] sm:$0xff] %v1100
    %1248 = vst [vmem:[#allocation22 + $0x20] sm:$0xff] %v1169
    %1249 = vst [vmem:[#allocation22 + $0x28] sm:$0xff] %v1171
    %1250 = vst [vmem:[#allocation22 + $0x30] sm:$0xff] %v1240
    %1251 = vst [vmem:[#allocation22 + $0x38] sm:$0xff] %v1242
    %v1252 = vlaneseq
    %v1253 = vand.u32 %v1252, 127
    %vm1254 = vcmp.lt.s32.totalorder %v1253, 4
    %v1255 = vsel %vm1254, %v1029, -1e+30
    %1256 = vmax.xlane.f32.xlu0 %v1255
    %v1257 = vpop.xlane.xlu0 %1256
    %v1258 = vsub.f32 %v1255, %v1257
    %v1259 = vmul.f32 %v1258, 1.442695
    %v1260 = vpow.pop %v1259
    %1261 = vadd.xlane.f32.xlu0 %v1260
    %v1262 = vpop.xlane.xlu0 %1261
    %v1263 = vrcp.pop %v1262
    %v1264 = vmul.f32 %v1260, %v1263
    %1265 = vst [vmem:[#allocation22 + $0x8] sm:$0xff] %v1264
    %v1266 = vsel %vm1254, %v1100, -1e+30
    %1267 = vmax.xlane.f32.xlu0 %v1266
    %v1268 = vpop.xlane.xlu0 %1267
    %v1269 = vsub.f32 %v1266, %v1268
    %v1270 = vmul.f32 %v1269, 1.442695
    %v1271 = vpow.pop %v1270
    %1272 = vadd.xlane.f32.xlu0 %v1271
    %v1273 = vpop.xlane.xlu0 %1272
    %v1274 = vrcp.pop %v1273
    %v1275 = vmul.f32 %v1271, %v1274
    %1276 = vst [vmem:[#allocation22 + $0x18] sm:$0xff] %v1275
    %v1277 = vsel %vm1254, %v1171, -1e+30
    %1278 = vmax.xlane.f32.xlu0 %v1277
    %v1279 = vpop.xlane.xlu0 %1278
    %v1280 = vsub.f32 %v1277, %v1279
    %v1281 = vmul.f32 %v1280, 1.442695
    %v1282 = vpow.pop %v1281
    %1283 = vadd.xlane.f32.xlu0 %v1282
    %v1284 = vpop.xlane.xlu0 %1283
    %v1285 = vrcp.pop %v1284
    %v1286 = vmul.f32 %v1282, %v1285
    %1287 = vst [vmem:[#allocation22 + $0x28] sm:$0xff] %v1286
    %v1288 = vsel %vm1254, %v1242, -1e+30
    %1289 = vmax.xlane.f32.xlu0 %v1288
    %v1290 = vpop.xlane.xlu0 %1289
    %v1291 = vsub.f32 %v1288, %v1290
    %v1292 = vmul.f32 %v1291, 1.442695
    %v1293 = vpow.pop %v1292
    %1294 = vadd.xlane.f32.xlu0 %v1293
    %v1295 = vpop.xlane.xlu0 %1294
    %v1296 = vrcp.pop %v1295
    %v1297 = vmul.f32 %v1293, %v1296
    %1298 = vst [vmem:[#allocation22 + $0x38] sm:$0xff] %v1297
    // Predicated region
    $region82: #{tpu_custom_call.1} parent=1 // pred_check
      _
    $region83: #{tpu_custom_call.1} parent=1 // pred_check_branch
      %1300 = sbr.rel (0) target = $region85
    $region84: #{tpu_custom_call.1} parent=1 // pred_region
      %s1302 = ssub.s32 1024, 1024
      %1303 = vsyncadd [#allocation7], %s1302
      %s1305 = sshll.u32 [#allocation22], 4
      %s1306 = int_to_ptr.vmem [resolvable:$true] %s1305
      %1308 = dma.vmem_to_hbm [thread:$0]  %s1306, 1024, %s10, [#allocation7]
    $region85: #{tpu_custom_call.1} parent=1 // pred_fallthru
      _
    // Predicated region
    $region86: #{tpu_custom_call.1} parent=1 // pred_check
      _
    $region87: #{tpu_custom_call.1} parent=1 // pred_check_branch
      %1310 = sbr.rel (0) target = $region89
    $region88: #{tpu_custom_call.1} parent=1 // pred_region
      %1311 = dma.done [#allocation7], 1024
    $region89: #{tpu_custom_call.1} parent=1 // pred_fallthru
      _
    %1312 = vsyncpa [#allocation6], 1
    %1313 = vsyncpa [#allocation9], 1
    %1314 = vsyncpa [#allocation12], 1
    %1315 = vsyncpa [#allocation15], 1
    %1316 = vsyncpa [#allocation18], 1
    %1317 = vsyncpa [#allocation21], 1
    %1318 = vsyncpa [#allocation7], 1

</llo_original>
